<compile_context>
chip_gen: v7x
topology: tpu7x:2x2x1
jax: 0.10.0
libtpu: 0.0.40
codegen_flags: <defaults>
</compile_context>

<pallas_src>
import jax
import jax.numpy as jnp
from jax.experimental import pallas as pl
from jax.experimental.pallas import tpu as pltpu

_NEG = jnp.float32(-1e30)   # padded-class bias so log_softmax of real classes is exact


def _dot(a, b):
    # bf16 x bf16 -> f32 accumulation on the MXU.
    return jnp.dot(a, b, preferred_element_type=jnp.float32)


# ----------------------------- kernels --------------------------------------

def _cheb_layer_kernel(L_ref, L2_ref, x_ref, w_ref, b_ref, out_ref):
    """One ChebConv(K=3) + ReLU node-row tile, single pass.

    out = relu( T0 @ (W0-W2) + (L@X) @ W1 + (L^2 @ X) @ (2 W2) + b )
    with X resident in VMEM and L / L^2 row-tiled (double-buffered streams).
    """
    tm = L_ref.shape[0]
    f = x_ref.shape[1]
    row0 = pl.multiple_of(pl.program_id(0) * tm, tm)
    t0 = x_ref[pl.ds(row0, tm), :]                      # (tm, F) bf16, sliced from resident X
    xf = x_ref[...]                                     # resident (N_pad, F) bf16
    t1 = _dot(L_ref[...], xf)                           # (tm, F) f32
    lt1 = _dot(L2_ref[...], xf)                         # (tm, F) f32  == L @ T1
    y = (_dot(t0, w_ref[:f, :])
         + _dot(t1.astype(jnp.bfloat16), w_ref[f:2 * f, :])
         + _dot(lt1.astype(jnp.bfloat16), w_ref[2 * f:, :])
         + b_ref[...])                                  # f32 epilogue
    out_ref[...] = jnp.maximum(y, 0.0).astype(out_ref.dtype)


def _cheb_layer_head_kernel(L_ref, L2_ref, x_ref, w_ref, b_ref,
                            p_ref, wfc_ref, bfc_ref, out_ref, pooled_ref):
    """Second ChebConv(K=3)+ReLU tile, with global_mean_pool + Linear +
    log_softmax fused: pooled accumulates across the row-tile grid in VMEM and
    the head runs once under pl.when(last).  h2 never goes to HBM."""
    i = pl.program_id(0)
    tm = L_ref.shape[0]
    f = x_ref.shape[1]

    @pl.when(i == 0)
    def _():
        pooled_ref[...] = jnp.zeros_like(pooled_ref)

    row0 = pl.multiple_of(i * tm, tm)
    t0 = x_ref[pl.ds(row0, tm), :]
    xf = x_ref[...]
    t1 = _dot(L_ref[...], xf)
    lt1 = _dot(L2_ref[...], xf)
    y = (_dot(t0, w_ref[:f, :])
         + _dot(t1.astype(jnp.bfloat16), w_ref[f:2 * f, :])
         + _dot(lt1.astype(jnp.bfloat16), w_ref[2 * f:, :])
         + b_ref[...])
    h = jnp.maximum(y, 0.0).astype(jnp.bfloat16)        # (tm, H)

    # global_mean_pool as a column-tiled P matmul, accumulated in f32.
    pooled_ref[...] += _dot(p_ref[...], h)              # (G_pad, H_pad)

    @pl.when(i == pl.num_programs(0) - 1)
    def _():
        logits = _dot(pooled_ref[...].astype(jnp.bfloat16), wfc_ref[...]) + bfc_ref[...]
        m = jnp.max(logits, axis=1, keepdims=True)
        z = logits - m
        lse = jnp.log(jnp.sum(jnp.exp(z), axis=1, keepdims=True))   # EUP slot
        out_ref[...] = z - lse                          # lane-dense (G_pad, 128) f32 slab


# ------------------------ budgeting / wrappers --------------------------------

def _round_up(v, m):
    return (v + m - 1) // m * m


def _vmem_capacity_bytes():
    try:
        return int(pltpu.get_tpu_info().vmem_capacity_bytes)
    except Exception:
        return 64 * 1024 * 1024          # assume the tightest budget (v7x per-TC)


def _pick_row_tile(n_pad):
    """Largest row tile such that the double-buffered bf16 L + L^2 tile streams
    stay within ~1/8 of this generation's VMEM and >=2 grid steps remain (so a
    'parallel' axis can shard rows across the two v7x TensorCores)."""
    cap = _vmem_capacity_bytes()
    stream_budget = min(cap // 8, 24 * 1024 * 1024)
    for t in (2048, 1024, 512, 256, 128):
        if n_pad % t:
            continue
        if n_pad // t < 2 and n_pad > 128:
            continue
        if 8 * t * n_pad <= stream_budget:     # 2 streams * 2 bufs * tm*n_pad * 2B
            return t
    return 128


def _layer_vmem_bytes(tm, n_pad, f, h, g_pad=0, c_pad=0):
    bf2, f4 = 2, 4
    ws = 2 * 2 * tm * n_pad * bf2        # L and L^2 row-tile streams, double-buffered
    ws += 2 * n_pad * f * bf2            # resident X (counted double-buffered)
    ws += 2 * 3 * f * h * bf2            # resident folded W
    ws += 2 * 1 * h * f4                 # bias
    ws += 2 * tm * h * bf2               # output tile / h staging
    ws += 3 * tm * f * f4 + tm * h * f4  # t1 / lt1 / t0 + y f32 intermediates
    if g_pad:
        ws += 2 * g_pad * tm * bf2       # P column-tile stream
        ws += 2 * h * c_pad * bf2 + 2 * c_pad * f4
        ws += g_pad * h * f4             # pooled scratch
        ws += 2 * g_pad * c_pad * f4     # output slab
    return ws


def _compiler_params(ws_bytes, parallel):
    cap = _vmem_capacity_bytes()
    need = int(1.5 * ws_bytes) + (4 << 20)          # headroom for Mosaic internals
    limit = None
    if need > (16 << 20):                           # only raise above smallest default
        limit = min(need, max(cap - (16 << 20), 32 << 20))
    return pltpu.CompilerParams(
        dimension_semantics=(("parallel",) if parallel else ("arbitrary",)),
        vmem_limit_bytes=limit)


def _fold_cheb_weights(w):
    # ChebConv(K=3):  T0@W0 + T1@W1 + (2 L T1 - T0)@W2
    #              == T0@(W0 - W2) + T1@W1 + (L@T1)@(2 W2)
    return jnp.concatenate([w[0] - w[2], w[1], 2.0 * w[2]], axis=0)   # (3F, H)


def prepare_graph_chebnet(L_hat, P, w1, b1, w2, b2, wfc, bfc):
    """One-time prep (amortized across forward calls): pad to MXU/lane-friendly
    shapes, fold the Chebyshev recurrence into the weights, precompute L^2, and
    cast the MXU operands to bf16.  Padded L/L^2 rows & cols and P columns are
    zero, so padded nodes cannot leak into real rows or the pooled means."""
    f32, bf16 = jnp.float32, jnp.bfloat16
    N = L_hat.shape[0]
    G = P.shape[0]
    F, H = w1.shape[1], w1.shape[2]
    C = wfc.shape[1]

    N_pad = _round_up(N, 128)
    F_pad = _round_up(F, 128)
    H_pad = _round_up(H, 128)
    C_pad = _round_up(C, 128)
    G_pad = _round_up(G, 8)

    Lp = jnp.zeros((N_pad, N_pad), f32).at[:N, :N].set(L_hat)
    L2p = jnp.dot(Lp, Lp, precision=jax.lax.Precision.HIGHEST)   # one-time N^3
    Pp = jnp.zeros((G_pad, N_pad), f32).at[:G, :N].set(P)

    w1p = jnp.zeros((3, F_pad, H_pad), f32).at[:, :F, :H].set(w1)
    w2p = jnp.zeros((3, H_pad, H_pad), f32).at[:, :H, :H].set(w2)
    b1p = jnp.zeros((1, H_pad), f32).at[:, :H].set(b1)
    b2p = jnp.zeros((1, H_pad), f32).at[:, :H].set(b2)
    wfcp = jnp.zeros((H_pad, C_pad), f32).at[:H, :C].set(wfc)
    bfcp = jnp.full((1, C_pad), _NEG, f32).at[:, :C].set(bfc)

    return dict(
        Lp=Lp.astype(bf16), L2p=L2p.astype(bf16), Pp=Pp.astype(bf16),
        wf1=_fold_cheb_weights(w1p).astype(bf16),
        wf2=_fold_cheb_weights(w2p).astype(bf16),
        b1p=b1p, b2p=b2p,                      # f32 epilogue operands
        wfcp=wfcp.astype(bf16), bfcp=bfcp,     # bfcp stays f32 (-1e30 not bf16-safe)
        dims=(N, F, H, C, G, N_pad, F_pad, H_pad, C_pad, G_pad))


def graph_chebnet_forward(x, prep):
    """Full GraphChebNet forward. Returns (G, C) f32 log-probabilities."""
    (N, F, H, C, G, N_pad, F_pad, H_pad, C_pad, G_pad) = prep["dims"]
    bf16 = jnp.bfloat16

    xp = jnp.zeros((N_pad, F_pad), bf16).at[:N, :F].set(x.astype(bf16))

    tm = _pick_row_tile(N_pad)
    grid = (N_pad // tm,)
    Lp, L2p = prep["Lp"], prep["L2p"]

    # Layer 1: ChebConv + ReLU, one pass, row-tiled ('parallel' -> megacore).
    h1 = pl.pallas_call(
        _cheb_layer_kernel,
        out_shape=jax.ShapeDtypeStruct((N_pad, H_pad), bf16),
        grid=grid,
        in_specs=[pl.BlockSpec((tm, N_pad), lambda i: (i, 0)),       # L row tile
                  pl.BlockSpec((tm, N_pad), lambda i: (i, 0)),       # L^2 row tile
                  pl.BlockSpec((N_pad, F_pad), lambda i: (0, 0)),    # X resident
                  pl.BlockSpec((3 * F_pad, H_pad), lambda i: (0, 0)),
                  pl.BlockSpec((1, H_pad), lambda i: (0, 0))],
        out_specs=pl.BlockSpec((tm, H_pad), lambda i: (i, 0)),
        compiler_params=_compiler_params(
            _layer_vmem_bytes(tm, N_pad, F_pad, H_pad), parallel=True),
    )(Lp, L2p, xp, prep["wf1"], prep["b1p"])

    # Layer 2 + global_mean_pool + Linear + log_softmax, fused.
    logp = pl.pallas_call(
        _cheb_layer_head_kernel,
        out_shape=jax.ShapeDtypeStruct((G_pad, C_pad), jnp.float32),
        grid=grid,
        in_specs=[pl.BlockSpec((tm, N_pad), lambda i: (i, 0)),       # L row tile
                  pl.BlockSpec((tm, N_pad), lambda i: (i, 0)),       # L^2 row tile
                  pl.BlockSpec((N_pad, H_pad), lambda i: (0, 0)),    # h1 resident
                  pl.BlockSpec((3 * H_pad, H_pad), lambda i: (0, 0)),
                  pl.BlockSpec((1, H_pad), lambda i: (0, 0)),
                  pl.BlockSpec((G_pad, tm), lambda i: (0, i)),       # P column tile
                  pl.BlockSpec((H_pad, C_pad), lambda i: (0, 0)),
                  pl.BlockSpec((1, C_pad), lambda i: (0, 0))],
        out_specs=pl.BlockSpec((G_pad, C_pad), lambda i: (0, 0)),    # accumulator-style
        scratch_shapes=[pltpu.VMEM((G_pad, H_pad), jnp.float32)],    # pooled sums
        compiler_params=_compiler_params(
            _layer_vmem_bytes(tm, N_pad, H_pad, H_pad, G_pad, C_pad), parallel=False),
    )(Lp, L2p, h1, prep["wf2"], prep["b2p"], prep["Pp"], prep["wfcp"], prep["bfcp"])

    return logp[:G, :C]


# ------------------------- graph preprocessing --------------------------------

def build_scaled_laplacian(edge_index, num_nodes):
    # PyG ChebConv default: sym normalization, lambda_max = 2.0
    #   L_hat = (2/lambda_max) * (I - D^-1/2 A D^-1/2) - I = -D^-1/2 A D^-1/2
    src, dst = edge_index
    A = jnp.zeros((num_nodes, num_nodes), jnp.float32)
    A = A.at[dst, src].add(1.0)
    deg = jnp.sum(A, axis=1)
    dinv = jnp.where(deg > 0, 1.0 / jnp.sqrt(deg), 0.0)
    return -(dinv[:, None] * A * dinv[None, :])


# ------------------------------ references ------------------------------------

def reference_forward_f32(x, L, w1, b1, w2, b2, P, wfc, bfc):
    """Exact (f32, HIGHEST) forward matching the PyTorch module."""
    hp = jax.lax.Precision.HIGHEST
    dot = lambda a, b: jnp.dot(a, b, precision=hp)

    def cheb(xi, w, b):
        t0 = xi
        t1 = dot(L, t0)
        t2 = 2.0 * dot(L, t1) - t0
        return dot(t0, w[0]) + dot(t1, w[1]) + dot(t2, w[2]) + b

    h = jnp.maximum(cheb(x, w1, b1), 0.0)
    h = jnp.maximum(cheb(h, w2, b2), 0.0)
    logits = dot(dot(P, h), wfc) + bfc
    return jax.nn.log_softmax(logits, axis=1)


def reference_forward_bf16(xp, prep):
    """Pure-JAX mirror of the kernel's exact bf16/f32 math (tight check)."""
    (N, F, H, C, G, *_rest) = prep["dims"]
    Lp, L2p = prep["Lp"], prep["L2p"]
    bf16 = jnp.bfloat16

    def layer(x_bf, wf, b):
        f = x_bf.shape[1]
        t1 = _dot(Lp, x_bf).astype(bf16)
        lt1 = _dot(L2p, x_bf).astype(bf16)
        y = (_dot(x_bf, wf[:f]) + _dot(t1, wf[f:2 * f]) + _dot(lt1, wf[2 * f:]) + b)
        return jnp.maximum(y, 0.0).astype(bf16)

    h = layer(xp, prep["wf1"], prep["b1p"])
    h = layer(h, prep["wf2"], prep["b2p"])
    pooled = _dot(prep["Pp"], h).astype(bf16)
    logits = _dot(pooled, prep["wfcp"]) + prep["bfcp"]
    return jax.nn.log_softmax(logits, axis=1)[:G, :C]


# ------------------------------- demo -----------------------------------------

if __name__ == "__main__":
    num_node_features = 16     # padded to 128 lanes in prepare_graph_chebnet
    hidden_channels = 128      # lane-dense hidden width
    num_classes = 4            # padded to 128 lanes in the output slab
    K = 3

    # Batch many small graphs so the kernel has real MXU work:
    # 32 ring graphs x 16 nodes = 512 nodes (multiple of 128).
    nodes_per_graph = 16
    num_graphs = 32
    N = nodes_per_graph * num_graphs

    srcs, dsts = [], []
    for g in range(num_graphs):
        base = g * nodes_per_graph
        for i in range(nodes_per_graph):
            a = base + i
            b = base + (i + 1) % nodes_per_graph
            srcs += [a, b]
            dsts += [b, a]
    edge_index = jnp.array([srcs, dsts], dtype=jnp.int32)
    batch = jnp.repeat(jnp.arange(num_graphs, dtype=jnp.int32), nodes_per_graph)

    key = jax.random.PRNGKey(0)
    keys = jax.random.split(key, 8)
    x = jax.random.normal(keys[0], (N, num_node_features), jnp.float32)

    def glorot(k, shape):
        fan_in, fan_out = shape[-2], shape[-1]
        s = jnp.sqrt(6.0 / (fan_in + fan_out))
        return jax.random.uniform(k, shape, jnp.float32, -s, s)

    w1 = glorot(keys[1], (K, num_node_features, hidden_channels))
    b1 = jax.random.uniform(keys[5], (1, hidden_channels), jnp.float32, -0.1, 0.1)
    w2 = glorot(keys[2], (K, hidden_channels, hidden_channels))
    b2 = jax.random.uniform(keys[6], (1, hidden_channels), jnp.float32, -0.1, 0.1)
    wfc = glorot(keys[3], (hidden_channels, num_classes))
    bfc = jax.random.uniform(keys[4], (1, num_classes), jnp.float32, -0.1, 0.1)

    L_hat = build_scaled_laplacian(edge_index, N)

    # global_mean_pool as a [G, N] averaging matrix.
    counts = jnp.bincount(batch, length=num_graphs).astype(jnp.float32)
    P = (jnp.arange(num_graphs)[:, None] == batch[None, :]).astype(jnp.float32)
    P = P / counts[:, None]

    # One-time prep (static across forward calls), then the 2-kernel forward.
    prep = prepare_graph_chebnet(L_hat, P, w1, b1, w2, b2, wfc, bfc)
    out = graph_chebnet_forward(x, prep)
    out = jax.block_until_ready(out)
    assert out.shape == (num_graphs, num_classes)

    # 1) Tight check vs. a pure-JAX mirror of the kernel's bf16/f32 math.
    xp = jnp.zeros(prep["Lp"].shape[:1] + (prep["wf1"].shape[0] // 3,),
                   jnp.bfloat16).at[:N, :num_node_features].set(x.astype(jnp.bfloat16))
    ref_bf16 = reference_forward_bf16(xp, prep)
    d1 = float(jnp.max(jnp.abs(out - ref_bf16)))
    assert jnp.allclose(out, ref_bf16, rtol=1e-2, atol=1e-2), f"mirror max|diff|={d1}"

    # 2) Semantic fidelity vs. the exact f32 model, within a bf16 error budget.
    ref_f32 = reference_forward_f32(x, L_hat, w1, b1, w2, b2, P, wfc, bfc)
    d2 = float(jnp.max(jnp.abs(out - ref_f32)))
    assert jnp.allclose(out, ref_f32, rtol=0.05, atol=0.1), f"f32 max|diff|={d2}"

    print("KERNEL_OK")
</pallas_src>

<mosaic_0001>
module attributes {stable_mosaic.version = 11 : i64} {
  func.func @_cheb_layer_kernel(%arg0: i32, %arg1: memref<256x512xbf16, #tpu.memory_space<vmem>>, %arg2: memref<256x512xbf16, #tpu.memory_space<vmem>>, %arg3: memref<512x128xbf16, #tpu.memory_space<vmem>>, %arg4: memref<384x128xbf16, #tpu.memory_space<vmem>>, %arg5: memref<1x128xf32, #tpu.memory_space<vmem>>, %arg6: memref<256x128xbf16, #tpu.memory_space<vmem>>) attributes {dimension_semantics = [#tpu.dimension_semantics<parallel>], iteration_bounds = array<i64: 2>, scalar_prefetch = 0 : i64, scratch_operands = 0 : i64, tpu.core_type = #tpu.core_type<tc>, window_params = [{transform_indices = @transform_0, window_bounds = array<i64: 256, 512>}, {transform_indices = @transform_1, window_bounds = array<i64: 256, 512>}, {pipeline_mode = #tpu.pipeline_mode<synchronous>, transform_indices = @transform_2, window_bounds = array<i64: 512, 128>}, {pipeline_mode = #tpu.pipeline_mode<synchronous>, transform_indices = @transform_3, window_bounds = array<i64: 384, 128>}, {pipeline_mode = #tpu.pipeline_mode<synchronous>, transform_indices = @transform_4, window_bounds = array<i64: 1, 128>}, {transform_indices = @transform_5, window_bounds = array<i64: 256, 128>}]} {
    %c256_i32 = arith.constant 256 : i32
    %0 = arith.muli %arg0, %c256_i32 : i32
    %1 = tpu.assume_multiple %0, 256 : i32
    %2 = arith.index_cast %1 : i32 to index
    %c0 = arith.constant 0 : index
    %3 = vector.load %arg3[%2, %c0] : memref<512x128xbf16, #tpu.memory_space<vmem>>, vector<256x128xbf16>
    %c0_0 = arith.constant 0 : index
    %c0_1 = arith.constant 0 : index
    %4 = vector.load %arg3[%c0_0, %c0_1] : memref<512x128xbf16, #tpu.memory_space<vmem>>, vector<512x128xbf16>
    %c0_2 = arith.constant 0 : index
    %c0_3 = arith.constant 0 : index
    %5 = vector.load %arg1[%c0_2, %c0_3] : memref<256x512xbf16, #tpu.memory_space<vmem>>, vector<256x512xbf16>
    %cst = arith.constant dense<0.000000e+00> : vector<256x128xf32>
    %6 = tpu.matmul %5, %4, %cst {dimension_numbers = #tpu.dot_dimension_numbers<[1], [0], [0], [1], [0, 0, 1, 1], [], []>} : vector<256x512xbf16>, vector<512x128xbf16>, vector<256x128xf32> -> vector<256x128xf32>
    %c0_4 = arith.constant 0 : index
    %c0_5 = arith.constant 0 : index
    %7 = vector.load %arg2[%c0_4, %c0_5] : memref<256x512xbf16, #tpu.memory_space<vmem>>, vector<256x512xbf16>
    %cst_6 = arith.constant dense<0.000000e+00> : vector<256x128xf32>
    %8 = tpu.matmul %7, %4, %cst_6 {dimension_numbers = #tpu.dot_dimension_numbers<[1], [0], [0], [1], [0, 0, 1, 1], [], []>} : vector<256x512xbf16>, vector<512x128xbf16>, vector<256x128xf32> -> vector<256x128xf32>
    %c0_7 = arith.constant 0 : index
    %c0_8 = arith.constant 0 : index
    %9 = vector.load %arg4[%c0_7, %c0_8] : memref<384x128xbf16, #tpu.memory_space<vmem>>, vector<128x128xbf16>
    %cst_9 = arith.constant dense<0.000000e+00> : vector<256x128xf32>
    %10 = tpu.matmul %3, %9, %cst_9 {dimension_numbers = #tpu.dot_dimension_numbers<[1], [0], [0], [1], [0, 0, 1, 1], [], []>} : vector<256x128xbf16>, vector<128x128xbf16>, vector<256x128xf32> -> vector<256x128xf32>
    %11 = arith.truncf %6 : vector<256x128xf32> to vector<256x128xbf16>
    %c128 = arith.constant 128 : index
    %c0_10 = arith.constant 0 : index
    %12 = vector.load %arg4[%c128, %c0_10] : memref<384x128xbf16, #tpu.memory_space<vmem>>, vector<128x128xbf16>
    %cst_11 = arith.constant dense<0.000000e+00> : vector<256x128xf32>
    %13 = tpu.matmul %11, %12, %cst_11 {dimension_numbers = #tpu.dot_dimension_numbers<[1], [0], [0], [1], [0, 0, 1, 1], [], []>} : vector<256x128xbf16>, vector<128x128xbf16>, vector<256x128xf32> -> vector<256x128xf32>
    %14 = arith.addf %10, %13 : vector<256x128xf32>
    %15 = arith.truncf %8 : vector<256x128xf32> to vector<256x128xbf16>
    %c256 = arith.constant 256 : index
    %c0_12 = arith.constant 0 : index
    %16 = vector.load %arg4[%c256, %c0_12] : memref<384x128xbf16, #tpu.memory_space<vmem>>, vector<128x128xbf16>
    %cst_13 = arith.constant dense<0.000000e+00> : vector<256x128xf32>
    %17 = tpu.matmul %15, %16, %cst_13 {dimension_numbers = #tpu.dot_dimension_numbers<[1], [0], [0], [1], [0, 0, 1, 1], [], []>} : vector<256x128xbf16>, vector<128x128xbf16>, vector<256x128xf32> -> vector<256x128xf32>
    %18 = arith.addf %14, %17 : vector<256x128xf32>
    %c0_14 = arith.constant 0 : index
    %c0_15 = arith.constant 0 : index
    %19 = vector.load %arg5[%c0_14, %c0_15] : memref<1x128xf32, #tpu.memory_space<vmem>>, vector<1x128xf32>
    %20 = vector.broadcast %19 : vector<1x128xf32> to vector<256x128xf32>
    %21 = arith.addf %18, %20 : vector<256x128xf32>
    %cst_16 = arith.constant 0.000000e+00 : f32
    %22 = vector.broadcast %cst_16 : f32 to vector<256x128xf32>
    %23 = arith.maximumf %21, %22 : vector<256x128xf32>
    %24 = arith.truncf %23 : vector<256x128xf32> to vector<256x128xbf16>
    %c0_17 = arith.constant 0 : index
    %c0_18 = arith.constant 0 : index
    %25 = vector.load %arg6[%c0_17, %c0_18] : memref<256x128xbf16, #tpu.memory_space<vmem>>, vector<256x128xbf16>
    tpu.vector_store %arg6[%c0_17, %c0_18], %24 {strides = array<i32>} : memref<256x128xbf16, #tpu.memory_space<vmem>>, vector<256x128xbf16>,
    return
  }
  func.func @transform_0(%arg0: i32) -> (i32, i32) {
    %c0_i32 = arith.constant 0 : i32
    %c0_i32_0 = arith.constant 0 : i32
    return %arg0, %c0_i32 : i32, i32
  }
  func.func @transform_1(%arg0: i32) -> (i32, i32) {
    %c0_i32 = arith.constant 0 : i32
    %c0_i32_0 = arith.constant 0 : i32
    return %arg0, %c0_i32 : i32, i32
  }
  func.func @transform_2(%arg0: i32) -> (i32, i32) {
    %c0_i32 = arith.constant 0 : i32
    %c0_i32_0 = arith.constant 0 : i32
    %c0_i32_1 = arith.constant 0 : i32
    return %c0_i32, %c0_i32_0 : i32, i32
  }
  func.func @transform_3(%arg0: i32) -> (i32, i32) {
    %c0_i32 = arith.constant 0 : i32
    %c0_i32_0 = arith.constant 0 : i32
    %c0_i32_1 = arith.constant 0 : i32
    return %c0_i32, %c0_i32_0 : i32, i32
  }
  func.func @transform_4(%arg0: i32) -> (i32, i32) {
    %c0_i32 = arith.constant 0 : i32
    %c0_i32_0 = arith.constant 0 : i32
    %c0_i32_1 = arith.constant 0 : i32
    return %c0_i32, %c0_i32_0 : i32, i32
  }
  func.func @transform_5(%arg0: i32) -> (i32, i32) {
    %c0_i32 = arith.constant 0 : i32
    %c0_i32_0 = arith.constant 0 : i32
    return %arg0, %c0_i32 : i32, i32
  }
}

</mosaic_0001>

<llo_original>
// kernel: tpu_custom_call.1
$region0: #{tpu_custom_call.1}
  #allocation0 [shape = 'u32[]', space=smem, size = 0x4, offset = 0x4, fixed_abs, tag = 'smem constant byte address 0x4 - core index']
  #allocation1 [shape = 'u32[144,128]{1,0:T(1,128)}', space=vmem, size = 0x12000, scoped, tag = 'internal scratch']
  %s0 = inlined_call_operand.hbm [shape: bf16[512,512], index: 0, kind: input, shape index: {}]
  %s1 = inlined_call_operand.hbm [shape: bf16[512,512], index: 1, kind: input, shape index: {}]
  %s2 = inlined_call_operand.hbm [shape: bf16[512,128], index: 2, kind: input, shape index: {}]
  %s3 = inlined_call_operand.hbm [shape: bf16[384,128], index: 3, kind: input, shape index: {}]
  %s4 = inlined_call_operand.vmem [shape: f32[1,128], index: 4, kind: input, shape index: {}]
  %s5 = inlined_call_operand.hbm [shape: bf16[512,128], index: 5, kind: output, shape index: {}]
  %s6 = sld [smem:[#allocation0]]
  $region69: #{tpu_custom_call.1} parent=0
    _
  %s8 = ssub.s32 1, %s6
  %s9 = scalar_select 0, %s8, %s6
  $region1: #{tpu_custom_call.1} parent=0
    #allocation2 [shape = 'u8[524288]{0}', space=vmem, size = 0x80000, scoped, tag = 'input window, operand 0']
    #allocation3 [shape = 's32[2]{0}', space=sflag, size = 0x8, scoped, tag = 'scoped memory for tpu_custom_call.1']
    #allocation4 [shape = 's32[2]{0}', space=sflag, size = 0x8, scoped, tag = 'scoped memory for tpu_custom_call.1']
    #allocation5 [shape = 'u8[524288]{0}', space=vmem, size = 0x80000, scoped, tag = 'input window, operand 1']
    #allocation6 [shape = 's32[2]{0}', space=sflag, size = 0x8, scoped, tag = 'scoped memory for tpu_custom_call.1']
    #allocation7 [shape = 'u8[131072]{0}', space=vmem, size = 0x20000, scoped, tag = 'input window, operand 2, single buffered']
    #allocation8 [shape = 'u8[98304]{0}', space=vmem, size = 0x18000, scoped, tag = 'input window, operand 3, single buffered']
    #allocation9 [shape = 's32[1]{0}', space=sflag, size = 0x4, scoped, tag = 'scoped memory for tpu_custom_call.1']
    #allocation10 [shape = 'u8[131072]{0}', space=vmem, size = 0x20000, scoped, tag = 'output window, operand 0']
    %10 = vsyncpa [#allocation3], 0
    %s11 = scalar_lea.sflag [#allocation3], 1
    %12 = vsyncpa %s11, 0
    %13 = vsyncpa [#allocation6], 0
    %s14 = scalar_lea.sflag [#allocation6], 1
    %15 = vsyncpa %s14, 0
    %16 = vsyncpa [#allocation9], 0
    %17 = vsyncpa [#allocation4], 0
    %s18 = scalar_lea.sflag [#allocation4], 1
    %19 = vsyncpa %s18, 0
    loop: start=0, step=1, limit=4
    $region2: #{tpu_custom_call.1} parent=1 // loop_pre_header
      _
    $region3: #{tpu_custom_call.1} parent=1 // loop_header
      %s21 = sphi 0, %s25
      %p22 = scmp.ge.s32.totalorder %s21, 4
      %s31 = sphi 0, %s33
      %s34 = sphi 0, %s31
      %s35 = sphi 0, %s34
      %s51 = sphi 0, %s35
      %s57 = sphi 0, %s59
      %s60 = sphi 0, %s57
      %s61 = sphi 0, %s60
      %s77 = sphi 0, %s61
      %s81 = sphi 0, %s81
      %s83 = sphi 0, %s81
      %s84 = sphi 0, %s83
      %s98 = sphi 0, %s84
      %s102 = sphi 0, %s102
      %s104 = sphi 0, %s102
      %s105 = sphi 0, %s104
      %s119 = sphi 0, %s105
      %s123 = sphi 0, %s123
      %s125 = sphi 0, %s123
      %s126 = sphi 0, %s125
      %s140 = sphi 0, %s126
      %s146 = sphi 0, %s148
      %s149 = sphi 0, %s146
      %s150 = sphi 0, %s149
      %s166 = sphi 0, %s150
    $region4: #{tpu_custom_call.1} parent=1 // loop_header_branch
      %24 = sbr.rel (%p22) target = $region8
    $region5: #{tpu_custom_call.1} parent=1 // loop_body
      %s26 = ssub.s32 %s21, 1
      %s27 = ssub.s32 %s21, 2
      %s28 = sadd.s32 %s21, 1
      %s29 = ssub.s32 %s21, %s28
      %p30 = scmp.eq.s32.totalorder %s29, 0
      %s32 = sadd.s32 %s31, 1
      %s33 = scalar_select %p30, %s31, %s32
      %p36 = pneg %p30
      %p37 = scmp.eq.s32.totalorder %s21, 1
      %p38 = por %p36, %p37
      %p39 = scmp.ne.s32.totalorder %s31, %s34
      %p40 = scmp.eq.s32.totalorder %s21, 0
      %p41 = por %p39, %p40
      %p42 = scmp.ne.s32.totalorder %s31, %s34
      %p43 = scmp.eq.s32.totalorder %s26, 1
      %p44 = por %p42, %p43
      %p45 = scmp.ne.s32.totalorder %s34, %s35
      %p46 = scmp.eq.s32.totalorder %s26, 0
      %p47 = por %p45, %p46
      %p48 = scmp.ne.s32.totalorder %s34, %s35
      %p49 = scmp.eq.s32.totalorder %s27, 1
      %p50 = por %p48, %p49
      %p52 = scmp.ne.s32.totalorder %s35, %s51
      %p53 = scmp.eq.s32.totalorder %s27, 0
      %p54 = por %p52, %p53
      %s55 = ssub.s32 %s21, %s28
      %p56 = scmp.eq.s32.totalorder %s55, 0
      %s58 = sadd.s32 %s57, 1
      %s59 = scalar_select %p56, %s57, %s58
      %p62 = pneg %p56
      %p63 = scmp.eq.s32.totalorder %s21, 1
      %p64 = por %p62, %p63
      %p65 = scmp.ne.s32.totalorder %s57, %s60
      %p66 = scmp.eq.s32.totalorder %s21, 0
      %p67 = por %p65, %p66
      %p68 = scmp.ne.s32.totalorder %s57, %s60
      %p69 = scmp.eq.s32.totalorder %s26, 1
      %p70 = por %p68, %p69
      %p71 = scmp.ne.s32.totalorder %s60, %s61
      %p72 = scmp.eq.s32.totalorder %s26, 0
      %p73 = por %p71, %p72
      %p74 = scmp.ne.s32.totalorder %s60, %s61
      %p75 = scmp.eq.s32.totalorder %s27, 1
      %p76 = por %p74, %p75
      %p78 = scmp.ne.s32.totalorder %s61, %s77
      %p79 = scmp.eq.s32.totalorder %s27, 0
      %p80 = por %p78, %p79
      %s82 = sadd.s32 %s81, 1
      %p85 = scmp.eq.s32.totalorder %s21, 1
      %p86 = scmp.ne.s32.totalorder %s81, %s83
      %p87 = scmp.eq.s32.totalorder %s21, 0
      %p88 = por %p86, %p87
      %p89 = scmp.ne.s32.totalorder %s81, %s83
      %p90 = scmp.eq.s32.totalorder %s26, 1
      %p91 = por %p89, %p90
      %p92 = scmp.ne.s32.totalorder %s83, %s84
      %p93 = scmp.eq.s32.totalorder %s26, 0
      %p94 = por %p92, %p93
      %p95 = scmp.ne.s32.totalorder %s83, %s84
      %p96 = scmp.eq.s32.totalorder %s27, 1
      %p97 = por %p95, %p96
      %p99 = scmp.ne.s32.totalorder %s84, %s98
      %p100 = scmp.eq.s32.totalorder %s27, 0
      %p101 = por %p99, %p100
      %s103 = sadd.s32 %s102, 1
      %p106 = scmp.eq.s32.totalorder %s21, 1
      %p107 = scmp.ne.s32.totalorder %s102, %s104
      %p108 = scmp.eq.s32.totalorder %s21, 0
      %p109 = por %p107, %p108
      %p110 = scmp.ne.s32.totalorder %s102, %s104
      %p111 = scmp.eq.s32.totalorder %s26, 1
      %p112 = por %p110, %p111
      %p113 = scmp.ne.s32.totalorder %s104, %s105
      %p114 = scmp.eq.s32.totalorder %s26, 0
      %p115 = por %p113, %p114
      %p116 = scmp.ne.s32.totalorder %s104, %s105
      %p117 = scmp.eq.s32.totalorder %s27, 1
      %p118 = por %p116, %p117
      %p120 = scmp.ne.s32.totalorder %s105, %s119
      %p121 = scmp.eq.s32.totalorder %s27, 0
      %p122 = por %p120, %p121
      %s124 = sadd.s32 %s123, 1
      %p127 = scmp.eq.s32.totalorder %s21, 1
      %p128 = scmp.ne.s32.totalorder %s123, %s125
      %p129 = scmp.eq.s32.totalorder %s21, 0
      %p130 = por %p128, %p129
      %p131 = scmp.ne.s32.totalorder %s123, %s125
      %p132 = scmp.eq.s32.totalorder %s26, 1
      %p133 = por %p131, %p132
      %p134 = scmp.ne.s32.totalorder %s125, %s126
      %p135 = scmp.eq.s32.totalorder %s26, 0
      %p136 = por %p134, %p135
      %p137 = scmp.ne.s32.totalorder %s125, %s126
      %p138 = scmp.eq.s32.totalorder %s27, 1
      %p139 = por %p137, %p138
      %p141 = scmp.ne.s32.totalorder %s126, %s140
      %p142 = scmp.eq.s32.totalorder %s27, 0
      %p143 = por %p141, %p142
      %s144 = ssub.s32 %s21, %s28
      %p145 = scmp.eq.s32.totalorder %s144, 0
      %s147 = sadd.s32 %s146, 1
      %s148 = scalar_select %p145, %s146, %s147
      %p151 = pneg %p145
      %p152 = scmp.eq.s32.totalorder %s21, 1
      %p153 = por %p151, %p152
      %p154 = scmp.ne.s32.totalorder %s146, %s149
      %p155 = scmp.eq.s32.totalorder %s21, 0
      %p156 = por %p154, %p155
      %p157 = scmp.ne.s32.totalorder %s146, %s149
      %p158 = scmp.eq.s32.totalorder %s26, 1
      %p159 = por %p157, %p158
      %p160 = scmp.ne.s32.totalorder %s149, %s150
      %p161 = scmp.eq.s32.totalorder %s26, 0
      %p162 = por %p160, %p161
      %p163 = scmp.ne.s32.totalorder %s149, %s150
      %p164 = scmp.eq.s32.totalorder %s27, 1
      %p165 = por %p163, %p164
      %p167 = scmp.ne.s32.totalorder %s150, %s166
      %p168 = scmp.eq.s32.totalorder %s27, 0
      %p169 = por %p167, %p168
      %p170 = scmp.le.s32.totalorder 1, %s21
      %p171 = scmp.lt.s32.totalorder %s21, 3
      %p172 = pnand %p170, %p171
      %p173 = pneg %p172
      // Predicated region
      $region9: #{tpu_custom_call.1} parent=5 // pred_check
        _
      $region10: #{tpu_custom_call.1} parent=5 // pred_check_branch
        %175 = sbr.rel (%p172) target = $region12
      $region11: #{tpu_custom_call.1} parent=5 // pred_region
        %s176 = ssub.s32 %s21, 1
        // Predicated region
        $region13: #{tpu_custom_call.1} parent=11 // pred_check
          %p177 = pneg %p94
        $region14: #{tpu_custom_call.1} parent=11 // pred_check_branch
          %179 = sbr.rel (%p177) target = $region16
        $region15: #{tpu_custom_call.1} parent=11 // pred_region
          %s181 = ssub.s32 4096, 4096
          %182 = vsyncadd [#allocation6], %s181
          %s183 = sshll.u32 [#allocation7], 4
          %s184 = int_to_ptr.vmem [resolvable:$true] %s183
          %189 = dma.hbm_to_vmem [thread:$0]  %s2, 4096, %s184, [#allocation6], 64, 64, 4
        $region16: #{tpu_custom_call.1} parent=11 // pred_fallthru
          _
        // Predicated region
        $region17: #{tpu_custom_call.1} parent=11 // pred_check
          %p190 = pneg %p115
        $region18: #{tpu_custom_call.1} parent=11 // pred_check_branch
          %192 = sbr.rel (%p190) target = $region20
        $region19: #{tpu_custom_call.1} parent=11 // pred_region
          %s194 = ssub.s32 3072, 3072
          %195 = vsyncadd [#allocation9], %s194
          %s196 = sshll.u32 [#allocation8], 4
          %s197 = int_to_ptr.vmem [resolvable:$true] %s196
          %202 = dma.hbm_to_vmem [thread:$0]  %s3, 3072, %s197, [#allocation9], 64, 64, 4
        $region20: #{tpu_custom_call.1} parent=11 // pred_fallthru
          _
        // Predicated region
        $region21: #{tpu_custom_call.1} parent=11 // pred_check
          %p203 = pneg %p136
        $region22: #{tpu_custom_call.1} parent=11 // pred_check_branch
          %205 = sbr.rel (%p203) target = $region24
        $region23: #{tpu_custom_call.1} parent=11 // pred_region
          _
        $region24: #{tpu_custom_call.1} parent=11 // pred_fallthru
          _
      $region12: #{tpu_custom_call.1} parent=5 // pred_fallthru
        _
      %p206 = scmp.lt.s32.totalorder %s21, 2
      // Predicated region
      $region25: #{tpu_custom_call.1} parent=5 // pred_check
        %p207 = pneg %p206
      $region26: #{tpu_custom_call.1} parent=5 // pred_check_branch
        %209 = sbr.rel (%p207) target = $region28
      $region27: #{tpu_custom_call.1} parent=5 // pred_region
        // Predicated region
        $region29: #{tpu_custom_call.1} parent=27 // pred_check
          %p210 = pneg %p41
        $region30: #{tpu_custom_call.1} parent=27 // pred_check_branch
          %212 = sbr.rel (%p210) target = $region32
        $region31: #{tpu_custom_call.1} parent=27 // pred_region
          %s213 = sand.u32 %s31, 1
          %s214 = scalar_lea.sflag [#allocation3], %s213
          %s215 = sand.u32 %s31, 1
          %s216 = smul.addr %s215, 512
          %s217 = scalar_lea.vmem [#allocation2], %s216
          %s218 = smul.u32 32, %s21
          %s220 = ssub.s32 8192, 8192
          %221 = vsyncadd %s214, %s220
          %s222 = smul.addr %s218, 4
          %s223 = smul.addr %s222, 64
          %s224 = scalar_lea.hbm %s0, %s223
          %s225 = sshll.u32 %s217, 4
          %s226 = int_to_ptr.vmem [resolvable:$true] %s225
          %231 = dma.hbm_to_vmem [thread:$0]  %s224, 8192, %s226, %s214, 256, 256, 16
        $region32: #{tpu_custom_call.1} parent=27 // pred_fallthru
          _
        // Predicated region
        $region33: #{tpu_custom_call.1} parent=27 // pred_check
          %p232 = pneg %p67
        $region34: #{tpu_custom_call.1} parent=27 // pred_check_branch
          %234 = sbr.rel (%p232) target = $region36
        $region35: #{tpu_custom_call.1} parent=27 // pred_region
          %s235 = sand.u32 %s21, 1
          %s236 = scalar_lea.sflag [#allocation6], %s235
          %s237 = sand.u32 %s57, 1
          %s238 = smul.addr %s237, 512
          %s239 = scalar_lea.vmem [#allocation5], %s238
          %s240 = smul.u32 32, %s21
          %s242 = ssub.s32 8192, 8192
          %243 = vsyncadd %s236, %s242
          %s244 = smul.addr %s240, 4
          %s245 = smul.addr %s244, 64
          %s246 = scalar_lea.hbm %s1, %s245
          %s247 = sshll.u32 %s239, 4
          %s248 = int_to_ptr.vmem [resolvable:$true] %s247
          %253 = dma.hbm_to_vmem [thread:$0]  %s246, 8192, %s248, %s236, 256, 256, 16
        $region36: #{tpu_custom_call.1} parent=27 // pred_fallthru
          _
      $region28: #{tpu_custom_call.1} parent=5 // pred_fallthru
        _
      %p254 = scmp.le.s32.totalorder 1, %s21
      %p255 = scmp.lt.s32.totalorder %s21, 3
      %p256 = pnand %p254, %p255
      %p257 = pneg %p256
      // Predicated region
      $region37: #{tpu_custom_call.1} parent=5 // pred_check
        _
      $region38: #{tpu_custom_call.1} parent=5 // pred_check_branch
        %259 = sbr.rel (%p256) target = $region40
      $region39: #{tpu_custom_call.1} parent=5 // pred_region
        %s260 = ssub.s32 %s21, 1
        %s261 = sand.u32 %s34, 1
        %s262 = scalar_lea.sflag [#allocation3], %s261
        %s263 = sand.u32 %s34, 1
        %s264 = smul.addr %s263, 512
        %s265 = scalar_lea.vmem [#allocation2], %s264
        // Predicated region
        $region41: #{tpu_custom_call.1} parent=39 // pred_check
          %p266 = pneg %p47
        $region42: #{tpu_custom_call.1} parent=39 // pred_check_branch
          %268 = sbr.rel (%p266) target = $region44
        $region43: #{tpu_custom_call.1} parent=39 // pred_region
          %269 = dma.done %s262, 8192
        $region44: #{tpu_custom_call.1} parent=39 // pred_fallthru
          _
        %s270 = sand.u32 %s26, 1
        %s271 = scalar_lea.sflag [#allocation6], %s270
        %s272 = sand.u32 %s60, 1
        %s273 = smul.addr %s272, 512
        %s274 = scalar_lea.vmem [#allocation5], %s273
        // Predicated region
        $region45: #{tpu_custom_call.1} parent=39 // pred_check
          %p275 = pneg %p73
        $region46: #{tpu_custom_call.1} parent=39 // pred_check_branch
          %277 = sbr.rel (%p275) target = $region48
        $region47: #{tpu_custom_call.1} parent=39 // pred_region
          %278 = dma.done %s271, 8192
        $region48: #{tpu_custom_call.1} parent=39 // pred_fallthru
          _
        // Predicated region
        $region49: #{tpu_custom_call.1} parent=39 // pred_check
          %p279 = pneg %p94
        $region50: #{tpu_custom_call.1} parent=39 // pred_check_branch
          %281 = sbr.rel (%p279) target = $region52
        $region51: #{tpu_custom_call.1} parent=39 // pred_region
          %282 = dma.done [#allocation6], 4096
        $region52: #{tpu_custom_call.1} parent=39 // pred_fallthru
          _
        // Predicated region
        $region53: #{tpu_custom_call.1} parent=39 // pred_check
          %p283 = pneg %p115
        $region54: #{tpu_custom_call.1} parent=39 // pred_check_branch
          %285 = sbr.rel (%p283) target = $region56
        $region55: #{tpu_custom_call.1} parent=39 // pred_region
          %286 = dma.done [#allocation9], 3072
        $region56: #{tpu_custom_call.1} parent=39 // pred_fallthru
          _
        %s287 = sand.u32 %s34, 1
        %s288 = scalar_lea.sflag [#allocation3], %s287
        %s289 = sand.u32 %s34, 1
        %s290 = smul.addr %s289, 512
        %s291 = scalar_lea.vmem [#allocation2], %s290
        %p292 = pneg %p47
        %p293 = pneg %p44
        %s294 = sand.u32 %s26, 1
        %s295 = scalar_lea.sflag [#allocation6], %s294
        %s296 = sand.u32 %s60, 1
        %s297 = smul.addr %s296, 512
        %s298 = scalar_lea.vmem [#allocation5], %s297
        %p299 = pneg %p73
        %p300 = pneg %p70
        %p301 = pneg %p94
        %p302 = pneg %p91
        %p303 = pneg %p115
        %p304 = pneg %p112
        %p305 = pneg %p136
        %p306 = pneg %p133
        %p307 = pneg %p162
        %p308 = pneg %p159
        %s309 = sand.u32 %s149, 1
        %s310 = scalar_lea.sflag [#allocation4], %s309
        %s311 = sand.u32 %s149, 1
        %s312 = smul.addr %s311, 128
        %s313 = scalar_lea.vmem [#allocation10], %s312
        %s314 = smul.u32 32, %s26
        %s315 = smul.u32 32, %s26
        %s316 = smul.u32 32, %s26
        %s318 = smul.u32 %s26, 256
        %s319 = sshra.s32 %s318, 3
        %s320 = sand.u32 %s318, 7
        %s321 = smul.addr %s319, 4
        %s322 = scalar_lea.vmem [#allocation7], %s321
        %v323 = vld [vmem:[%s322] sm:$0xf]
        %v324 = vld [vmem:[%s322 + $0x4] sm:$0xf]
        %v325 = vld [vmem:[%s322 + $0x8] sm:$0xf]
        %v326 = vld [vmem:[%s322 + $0xc] sm:$0xf]
        %v327 = vld [vmem:[%s322 + $0x10] sm:$0xf]
        %v328 = vld [vmem:[%s322 + $0x14] sm:$0xf]
        %v329 = vld [vmem:[%s322 + $0x18] sm:$0xf]
        %v330 = vld [vmem:[%s322 + $0x1c] sm:$0xf]
        %v331 = vld [vmem:[%s322 + $0x20] sm:$0xf]
        %v332 = vld [vmem:[%s322 + $0x24] sm:$0xf]
        %v333 = vld [vmem:[%s322 + $0x28] sm:$0xf]
        %v334 = vld [vmem:[%s322 + $0x2c] sm:$0xf]
        %v335 = vld [vmem:[%s322 + $0x30] sm:$0xf]
        %v336 = vld [vmem:[%s322 + $0x34] sm:$0xf]
        %v337 = vld [vmem:[%s322 + $0x38] sm:$0xf]
        %v338 = vld [vmem:[%s322 + $0x3c] sm:$0xf]
        %v339 = vld [vmem:[%s322 + $0x40] sm:$0xf]
        %v340 = vld [vmem:[%s322 + $0x44] sm:$0xf]
        %v341 = vld [vmem:[%s322 + $0x48] sm:$0xf]
        %v342 = vld [vmem:[%s322 + $0x4c] sm:$0xf]
        %v343 = vld [vmem:[%s322 + $0x50] sm:$0xf]
        %v344 = vld [vmem:[%s322 + $0x54] sm:$0xf]
        %v345 = vld [vmem:[%s322 + $0x58] sm:$0xf]
        %v346 = vld [vmem:[%s322 + $0x5c] sm:$0xf]
        %v347 = vld [vmem:[%s322 + $0x60] sm:$0xf]
        %v348 = vld [vmem:[%s322 + $0x64] sm:$0xf]
        %v349 = vld [vmem:[%s322 + $0x68] sm:$0xf]
        %v350 = vld [vmem:[%s322 + $0x6c] sm:$0xf]
        %v351 = vld [vmem:[%s322 + $0x70] sm:$0xf]
        %v352 = vld [vmem:[%s322 + $0x74] sm:$0xf]
        %v353 = vld [vmem:[%s322 + $0x78] sm:$0xf]
        %v354 = vld [vmem:[%s322 + $0x7c] sm:$0xf]
        %v355 = vld [vmem:[#allocation7] sm:$0xf]
        %v356 = vld [vmem:[#allocation7 + $0x4] sm:$0xf]
        %v357 = vld [vmem:[#allocation7 + $0x8] sm:$0xf]
        %v358 = vld [vmem:[#allocation7 + $0xc] sm:$0xf]
        %v359 = vld [vmem:[#allocation7 + $0x10] sm:$0xf]
        %v360 = vld [vmem:[#allocation7 + $0x14] sm:$0xf]
        %v361 = vld [vmem:[#allocation7 + $0x18] sm:$0xf]
        %v362 = vld [vmem:[#allocation7 + $0x1c] sm:$0xf]
        %v363 = vld [vmem:[#allocation7 + $0x20] sm:$0xf]
        %v364 = vld [vmem:[#allocation7 + $0x24] sm:$0xf]
        %v365 = vld [vmem:[#allocation7 + $0x28] sm:$0xf]
        %v366 = vld [vmem:[#allocation7 + $0x2c] sm:$0xf]
        %v367 = vld [vmem:[#allocation7 + $0x30] sm:$0xf]
        %v368 = vld [vmem:[#allocation7 + $0x34] sm:$0xf]
        %v369 = vld [vmem:[#allocation7 + $0x38] sm:$0xf]
        %v370 = vld [vmem:[#allocation7 + $0x3c] sm:$0xf]
        %v371 = vld [vmem:[#allocation7 + $0x40] sm:$0xf]
        %v372 = vld [vmem:[#allocation7 + $0x44] sm:$0xf]
        %v373 = vld [vmem:[#allocation7 + $0x48] sm:$0xf]
        %v374 = vld [vmem:[#allocation7 + $0x4c] sm:$0xf]
        %v375 = vld [vmem:[#allocation7 + $0x50] sm:$0xf]
        %v376 = vld [vmem:[#allocation7 + $0x54] sm:$0xf]
        %v377 = vld [vmem:[#allocation7 + $0x58] sm:$0xf]
        %v378 = vld [vmem:[#allocation7 + $0x5c] sm:$0xf]
        %v379 = vld [vmem:[#allocation7 + $0x60] sm:$0xf]
        %v380 = vld [vmem:[#allocation7 + $0x64] sm:$0xf]
        %v381 = vld [vmem:[#allocation7 + $0x68] sm:$0xf]
        %v382 = vld [vmem:[#allocation7 + $0x6c] sm:$0xf]
        %v383 = vld [vmem:[#allocation7 + $0x70] sm:$0xf]
        %v384 = vld [vmem:[#allocation7 + $0x74] sm:$0xf]
        %v385 = vld [vmem:[#allocation7 + $0x78] sm:$0xf]
        %v386 = vld [vmem:[#allocation7 + $0x7c] sm:$0xf]
        %v387 = vld [vmem:[#allocation7 + $0x80] sm:$0xf]
        %v388 = vld [vmem:[#allocation7 + $0x84] sm:$0xf]
        %v389 = vld [vmem:[#allocation7 + $0x88] sm:$0xf]
        %v390 = vld [vmem:[#allocation7 + $0x8c] sm:$0xf]
        %v391 = vld [vmem:[#allocation7 + $0x90] sm:$0xf]
        %v392 = vld [vmem:[#allocation7 + $0x94] sm:$0xf]
        %v393 = vld [vmem:[#allocation7 + $0x98] sm:$0xf]
        %v394 = vld [vmem:[#allocation7 + $0x9c] sm:$0xf]
        %v395 = vld [vmem:[#allocation7 + $0xa0] sm:$0xf]
        %v396 = vld [vmem:[#allocation7 + $0xa4] sm:$0xf]
        %v397 = vld [vmem:[#allocation7 + $0xa8] sm:$0xf]
        %v398 = vld [vmem:[#allocation7 + $0xac] sm:$0xf]
        %v399 = vld [vmem:[#allocation7 + $0xb0] sm:$0xf]
        %v400 = vld [vmem:[#allocation7 + $0xb4] sm:$0xf]
        %v401 = vld [vmem:[#allocation7 + $0xb8] sm:$0xf]
        %v402 = vld [vmem:[#allocation7 + $0xbc] sm:$0xf]
        %v403 = vld [vmem:[#allocation7 + $0xc0] sm:$0xf]
        %v404 = vld [vmem:[#allocation7 + $0xc4] sm:$0xf]
        %v405 = vld [vmem:[#allocation7 + $0xc8] sm:$0xf]
        %v406 = vld [vmem:[#allocation7 + $0xcc] sm:$0xf]
        %v407 = vld [vmem:[#allocation7 + $0xd0] sm:$0xf]
        %v408 = vld [vmem:[#allocation7 + $0xd4] sm:$0xf]
        %v409 = vld [vmem:[#allocation7 + $0xd8] sm:$0xf]
        %v410 = vld [vmem:[#allocation7 + $0xdc] sm:$0xf]
        %v411 = vld [vmem:[#allocation7 + $0xe0] sm:$0xf]
        %v412 = vld [vmem:[#allocation7 + $0xe4] sm:$0xf]
        %v413 = vld [vmem:[#allocation7 + $0xe8] sm:$0xf]
        %v414 = vld [vmem:[#allocation7 + $0xec] sm:$0xf]
        %v415 = vld [vmem:[#allocation7 + $0xf0] sm:$0xf]
        %v416 = vld [vmem:[#allocation7 + $0xf4] sm:$0xf]
        %v417 = vld [vmem:[#allocation7 + $0xf8] sm:$0xf]
        %v418 = vld [vmem:[#allocation7 + $0xfc] sm:$0xf]
        %v419 = vld [vmem:[%s265] sm:$0xff]
        %v420 = vld [vmem:[%s265 + $0x8] sm:$0xff]
        %v421 = vld [vmem:[%s265 + $0x10] sm:$0xff]
        %v422 = vld [vmem:[%s265 + $0x18] sm:$0xff]
        %v423 = vld [vmem:[%s265 + $0x20] sm:$0xff]
        %v424 = vld [vmem:[%s265 + $0x28] sm:$0xff]
        %v425 = vld [vmem:[%s265 + $0x30] sm:$0xff]
        %v426 = vld [vmem:[%s265 + $0x38] sm:$0xff]
        %v427 = vld [vmem:[%s265 + $0x40] sm:$0xff]
        %v428 = vld [vmem:[%s265 + $0x48] sm:$0xff]
        %v429 = vld [vmem:[%s265 + $0x50] sm:$0xff]
        %v430 = vld [vmem:[%s265 + $0x58] sm:$0xff]
        %v431 = vld [vmem:[%s265 + $0x60] sm:$0xff]
        %v432 = vld [vmem:[%s265 + $0x68] sm:$0xff]
        %v433 = vld [vmem:[%s265 + $0x70] sm:$0xff]
        %v434 = vld [vmem:[%s265 + $0x78] sm:$0xff]
        %v435 = vld [vmem:[%s265 + $0x80] sm:$0xff]
        %v436 = vld [vmem:[%s265 + $0x88] sm:$0xff]
        %v437 = vld [vmem:[%s265 + $0x90] sm:$0xff]
        %v438 = vld [vmem:[%s265 + $0x98] sm:$0xff]
        %v439 = vld [vmem:[%s265 + $0xa0] sm:$0xff]
        %v440 = vld [vmem:[%s265 + $0xa8] sm:$0xff]
        %v441 = vld [vmem:[%s265 + $0xb0] sm:$0xff]
        %v442 = vld [vmem:[%s265 + $0xb8] sm:$0xff]
        %v443 = vld [vmem:[%s265 + $0xc0] sm:$0xff]
        %v444 = vld [vmem:[%s265 + $0xc8] sm:$0xff]
        %v445 = vld [vmem:[%s265 + $0xd0] sm:$0xff]
        %v446 = vld [vmem:[%s265 + $0xd8] sm:$0xff]
        %v447 = vld [vmem:[%s265 + $0xe0] sm:$0xff]
        %v448 = vld [vmem:[%s265 + $0xe8] sm:$0xff]
        %v449 = vld [vmem:[%s265 + $0xf0] sm:$0xff]
        %v450 = vld [vmem:[%s265 + $0xf8] sm:$0xff]
        %v451 = vld [vmem:[%s265 + $0x100] sm:$0xff]
        %v452 = vld [vmem:[%s265 + $0x108] sm:$0xff]
        %v453 = vld [vmem:[%s265 + $0x110] sm:$0xff]
        %v454 = vld [vmem:[%s265 + $0x118] sm:$0xff]
        %v455 = vld [vmem:[%s265 + $0x120] sm:$0xff]
        %v456 = vld [vmem:[%s265 + $0x128] sm:$0xff]
        %v457 = vld [vmem:[%s265 + $0x130] sm:$0xff]
        %v458 = vld [vmem:[%s265 + $0x138] sm:$0xff]
        %v459 = vld [vmem:[%s265 + $0x140] sm:$0xff]
        %v460 = vld [vmem:[%s265 + $0x148] sm:$0xff]
        %v461 = vld [vmem:[%s265 + $0x150] sm:$0xff]
        %v462 = vld [vmem:[%s265 + $0x158] sm:$0xff]
        %v463 = vld [vmem:[%s265 + $0x160] sm:$0xff]
        %v464 = vld [vmem:[%s265 + $0x168] sm:$0xff]
        %v465 = vld [vmem:[%s265 + $0x170] sm:$0xff]
        %v466 = vld [vmem:[%s265 + $0x178] sm:$0xff]
        %v467 = vld [vmem:[%s265 + $0x180] sm:$0xff]
        %v468 = vld [vmem:[%s265 + $0x188] sm:$0xff]
        %v469 = vld [vmem:[%s265 + $0x190] sm:$0xff]
        %v470 = vld [vmem:[%s265 + $0x198] sm:$0xff]
        %v471 = vld [vmem:[%s265 + $0x1a0] sm:$0xff]
        %v472 = vld [vmem:[%s265 + $0x1a8] sm:$0xff]
        %v473 = vld [vmem:[%s265 + $0x1b0] sm:$0xff]
        %v474 = vld [vmem:[%s265 + $0x1b8] sm:$0xff]
        %v475 = vld [vmem:[%s265 + $0x1c0] sm:$0xff]
        %v476 = vld [vmem:[%s265 + $0x1c8] sm:$0xff]
        %v477 = vld [vmem:[%s265 + $0x1d0] sm:$0xff]
        %v478 = vld [vmem:[%s265 + $0x1d8] sm:$0xff]
        %v479 = vld [vmem:[%s265 + $0x1e0] sm:$0xff]
        %v480 = vld [vmem:[%s265 + $0x1e8] sm:$0xff]
        %v481 = vld [vmem:[%s265 + $0x1f0] sm:$0xff]
        %v482 = vld [vmem:[%s265 + $0x1f8] sm:$0xff]
        %v547 = vunpack.c.l.b16 %v419
        %v548 = vunpack.c.h.b16 %v419
        %v549 = vunpack.c.l.b16 %v420
        %v550 = vunpack.c.h.b16 %v420
        %v551 = vunpack.c.l.b16 %v421
        %v552 = vunpack.c.h.b16 %v421
        %v553 = vunpack.c.l.b16 %v422
        %v554 = vunpack.c.h.b16 %v422
        %v555 = vunpack.c.l.b16 %v423
        %v556 = vunpack.c.h.b16 %v423
        %v557 = vunpack.c.l.b16 %v424
        %v558 = vunpack.c.h.b16 %v424
        %v559 = vunpack.c.l.b16 %v425
        %v560 = vunpack.c.h.b16 %v425
        %v561 = vunpack.c.l.b16 %v426
        %v562 = vunpack.c.h.b16 %v426
        %v563 = vunpack.c.l.b16 %v427
        %v564 = vunpack.c.h.b16 %v427
        %v565 = vunpack.c.l.b16 %v428
        %v566 = vunpack.c.h.b16 %v428
        %v567 = vunpack.c.l.b16 %v429
        %v568 = vunpack.c.h.b16 %v429
        %v569 = vunpack.c.l.b16 %v430
        %v570 = vunpack.c.h.b16 %v430
        %v571 = vunpack.c.l.b16 %v431
        %v572 = vunpack.c.h.b16 %v431
        %v573 = vunpack.c.l.b16 %v432
        %v574 = vunpack.c.h.b16 %v432
        %v575 = vunpack.c.l.b16 %v433
        %v576 = vunpack.c.h.b16 %v433
        %v577 = vunpack.c.l.b16 %v434
        %v578 = vunpack.c.h.b16 %v434
        %v579 = vunpack.c.l.b16 %v435
        %v580 = vunpack.c.h.b16 %v435
        %v581 = vunpack.c.l.b16 %v436
        %v582 = vunpack.c.h.b16 %v436
        %v583 = vunpack.c.l.b16 %v437
        %v584 = vunpack.c.h.b16 %v437
        %v585 = vunpack.c.l.b16 %v438
        %v586 = vunpack.c.h.b16 %v438
        %v587 = vunpack.c.l.b16 %v439
        %v588 = vunpack.c.h.b16 %v439
        %v589 = vunpack.c.l.b16 %v440
        %v590 = vunpack.c.h.b16 %v440
        %v591 = vunpack.c.l.b16 %v441
        %v592 = vunpack.c.h.b16 %v441
        %v593 = vunpack.c.l.b16 %v442
        %v594 = vunpack.c.h.b16 %v442
        %v595 = vunpack.c.l.b16 %v443
        %v596 = vunpack.c.h.b16 %v443
        %v597 = vunpack.c.l.b16 %v444
        %v598 = vunpack.c.h.b16 %v444
        %v599 = vunpack.c.l.b16 %v445
        %v600 = vunpack.c.h.b16 %v445
        %v601 = vunpack.c.l.b16 %v446
        %v602 = vunpack.c.h.b16 %v446
        %v603 = vunpack.c.l.b16 %v447
        %v604 = vunpack.c.h.b16 %v447
        %v605 = vunpack.c.l.b16 %v448
        %v606 = vunpack.c.h.b16 %v448
        %v607 = vunpack.c.l.b16 %v449
        %v608 = vunpack.c.h.b16 %v449
        %v609 = vunpack.c.l.b16 %v450
        %v610 = vunpack.c.h.b16 %v450
        %v611 = vunpack.c.l.b16 %v451
        %v612 = vunpack.c.h.b16 %v451
        %v613 = vunpack.c.l.b16 %v452
        %v614 = vunpack.c.h.b16 %v452
        %v615 = vunpack.c.l.b16 %v453
        %v616 = vunpack.c.h.b16 %v453
        %v617 = vunpack.c.l.b16 %v454
        %v618 = vunpack.c.h.b16 %v454
        %v619 = vunpack.c.l.b16 %v455
        %v620 = vunpack.c.h.b16 %v455
        %v621 = vunpack.c.l.b16 %v456
        %v622 = vunpack.c.h.b16 %v456
        %v623 = vunpack.c.l.b16 %v457
        %v624 = vunpack.c.h.b16 %v457
        %v625 = vunpack.c.l.b16 %v458
        %v626 = vunpack.c.h.b16 %v458
        %v627 = vunpack.c.l.b16 %v459
        %v628 = vunpack.c.h.b16 %v459
        %v629 = vunpack.c.l.b16 %v460
        %v630 = vunpack.c.h.b16 %v460
        %v631 = vunpack.c.l.b16 %v461
        %v632 = vunpack.c.h.b16 %v461
        %v633 = vunpack.c.l.b16 %v462
        %v634 = vunpack.c.h.b16 %v462
        %v635 = vunpack.c.l.b16 %v463
        %v636 = vunpack.c.h.b16 %v463
        %v637 = vunpack.c.l.b16 %v464
        %v638 = vunpack.c.h.b16 %v464
        %v639 = vunpack.c.l.b16 %v465
        %v640 = vunpack.c.h.b16 %v465
        %v641 = vunpack.c.l.b16 %v466
        %v642 = vunpack.c.h.b16 %v466
        %v643 = vunpack.c.l.b16 %v467
        %v644 = vunpack.c.h.b16 %v467
        %v645 = vunpack.c.l.b16 %v468
        %v646 = vunpack.c.h.b16 %v468
        %v647 = vunpack.c.l.b16 %v469
        %v648 = vunpack.c.h.b16 %v469
        %v649 = vunpack.c.l.b16 %v470
        %v650 = vunpack.c.h.b16 %v470
        %v651 = vunpack.c.l.b16 %v471
        %v652 = vunpack.c.h.b16 %v471
        %v653 = vunpack.c.l.b16 %v472
        %v654 = vunpack.c.h.b16 %v472
        %v655 = vunpack.c.l.b16 %v473
        %v656 = vunpack.c.h.b16 %v473
        %v657 = vunpack.c.l.b16 %v474
        %v658 = vunpack.c.h.b16 %v474
        %v659 = vunpack.c.l.b16 %v475
        %v660 = vunpack.c.h.b16 %v475
        %v661 = vunpack.c.l.b16 %v476
        %v662 = vunpack.c.h.b16 %v476
        %v663 = vunpack.c.l.b16 %v477
        %v664 = vunpack.c.h.b16 %v477
        %v665 = vunpack.c.l.b16 %v478
        %v666 = vunpack.c.h.b16 %v478
        %v667 = vunpack.c.l.b16 %v479
        %v668 = vunpack.c.h.b16 %v479
        %v669 = vunpack.c.l.b16 %v480
        %v670 = vunpack.c.h.b16 %v480
        %v671 = vunpack.c.l.b16 %v481
        %v672 = vunpack.c.h.b16 %v481
        %v673 = vunpack.c.l.b16 %v482
        %v674 = vunpack.c.h.b16 %v482
        %v675 = vpack.c.b16 %v551, %v547
        %v676 = vpack.c.b16 %v552, %v548
        %v677 = vpack.c.b16 %v553, %v549
        %v678 = vpack.c.b16 %v554, %v550
        %v679 = vpack.c.b16 %v559, %v555
        %v680 = vpack.c.b16 %v560, %v556
        %v681 = vpack.c.b16 %v561, %v557
        %v682 = vpack.c.b16 %v562, %v558
        %v683 = vpack.c.b16 %v567, %v563
        %v684 = vpack.c.b16 %v568, %v564
        %v685 = vpack.c.b16 %v569, %v565
        %v686 = vpack.c.b16 %v570, %v566
        %v687 = vpack.c.b16 %v575, %v571
        %v688 = vpack.c.b16 %v576, %v572
        %v689 = vpack.c.b16 %v577, %v573
        %v690 = vpack.c.b16 %v578, %v574
        %v691 = vpack.c.b16 %v583, %v579
        %v692 = vpack.c.b16 %v584, %v580
        %v693 = vpack.c.b16 %v585, %v581
        %v694 = vpack.c.b16 %v586, %v582
        %v695 = vpack.c.b16 %v591, %v587
        %v696 = vpack.c.b16 %v592, %v588
        %v697 = vpack.c.b16 %v593, %v589
        %v698 = vpack.c.b16 %v594, %v590
        %v699 = vpack.c.b16 %v599, %v595
        %v700 = vpack.c.b16 %v600, %v596
        %v701 = vpack.c.b16 %v601, %v597
        %v702 = vpack.c.b16 %v602, %v598
        %v703 = vpack.c.b16 %v607, %v603
        %v704 = vpack.c.b16 %v608, %v604
        %v705 = vpack.c.b16 %v609, %v605
        %v706 = vpack.c.b16 %v610, %v606
        %v707 = vpack.c.b16 %v615, %v611
        %v708 = vpack.c.b16 %v616, %v612
        %v709 = vpack.c.b16 %v617, %v613
        %v710 = vpack.c.b16 %v618, %v614
        %v711 = vpack.c.b16 %v623, %v619
        %v712 = vpack.c.b16 %v624, %v620
        %v713 = vpack.c.b16 %v625, %v621
        %v714 = vpack.c.b16 %v626, %v622
        %v715 = vpack.c.b16 %v631, %v627
        %v716 = vpack.c.b16 %v632, %v628
        %v717 = vpack.c.b16 %v633, %v629
        %v718 = vpack.c.b16 %v634, %v630
        %v719 = vpack.c.b16 %v639, %v635
        %v720 = vpack.c.b16 %v640, %v636
        %v721 = vpack.c.b16 %v641, %v637
        %v722 = vpack.c.b16 %v642, %v638
        %v723 = vpack.c.b16 %v647, %v643
        %v724 = vpack.c.b16 %v648, %v644
        %v725 = vpack.c.b16 %v649, %v645
        %v726 = vpack.c.b16 %v650, %v646
        %v727 = vpack.c.b16 %v655, %v651
        %v728 = vpack.c.b16 %v656, %v652
        %v729 = vpack.c.b16 %v657, %v653
        %v730 = vpack.c.b16 %v658, %v654
        %v731 = vpack.c.b16 %v663, %v659
        %v732 = vpack.c.b16 %v664, %v660
        %v733 = vpack.c.b16 %v665, %v661
        %v734 = vpack.c.b16 %v666, %v662
        %v735 = vpack.c.b16 %v671, %v667
        %v736 = vpack.c.b16 %v672, %v668
        %v737 = vpack.c.b16 %v673, %v669
        %v738 = vpack.c.b16 %v674, %v670
        %v867 = vunpack.c.l.b16 %v355
        %v868 = vunpack.c.l.b16 %v356
        %v869 = vunpack.c.l.b16 %v357
        %v870 = vunpack.c.l.b16 %v358
        %v871 = vunpack.c.l.b16 %v359
        %v872 = vunpack.c.l.b16 %v360
        %v873 = vunpack.c.l.b16 %v361
        %v874 = vunpack.c.l.b16 %v362
        %v875 = vunpack.c.l.b16 %v363
        %v876 = vunpack.c.l.b16 %v364
        %v877 = vunpack.c.l.b16 %v365
        %v878 = vunpack.c.l.b16 %v366
        %v879 = vunpack.c.l.b16 %v367
        %v880 = vunpack.c.l.b16 %v368
        %v881 = vunpack.c.l.b16 %v369
        %v882 = vunpack.c.l.b16 %v370
        %v883 = vunpack.c.l.b16 %v371
        %v884 = vunpack.c.l.b16 %v372
        %v885 = vunpack.c.l.b16 %v373
        %v886 = vunpack.c.l.b16 %v374
        %v887 = vunpack.c.l.b16 %v375
        %v888 = vunpack.c.l.b16 %v376
        %v889 = vunpack.c.l.b16 %v377
        %v890 = vunpack.c.l.b16 %v378
        %v891 = vunpack.c.l.b16 %v379
        %v892 = vunpack.c.l.b16 %v380
        %v893 = vunpack.c.l.b16 %v381
        %v894 = vunpack.c.l.b16 %v382
        %v895 = vunpack.c.l.b16 %v383
        %v896 = vunpack.c.l.b16 %v384
        %v897 = vunpack.c.l.b16 %v385
        %v898 = vunpack.c.l.b16 %v386
        %v899 = vunpack.c.l.b16 %v387
        %v900 = vunpack.c.l.b16 %v388
        %v901 = vunpack.c.l.b16 %v389
        %v902 = vunpack.c.l.b16 %v390
        %v903 = vunpack.c.l.b16 %v391
        %v904 = vunpack.c.l.b16 %v392
        %v905 = vunpack.c.l.b16 %v393
        %v906 = vunpack.c.l.b16 %v394
        %v907 = vunpack.c.l.b16 %v395
        %v908 = vunpack.c.l.b16 %v396
        %v909 = vunpack.c.l.b16 %v397
        %v910 = vunpack.c.l.b16 %v398
        %v911 = vunpack.c.l.b16 %v399
        %v912 = vunpack.c.l.b16 %v400
        %v913 = vunpack.c.l.b16 %v401
        %v914 = vunpack.c.l.b16 %v402
        %v915 = vunpack.c.l.b16 %v403
        %v916 = vunpack.c.l.b16 %v404
        %v917 = vunpack.c.l.b16 %v405
        %v918 = vunpack.c.l.b16 %v406
        %v919 = vunpack.c.l.b16 %v407
        %v920 = vunpack.c.l.b16 %v408
        %v921 = vunpack.c.l.b16 %v409
        %v922 = vunpack.c.l.b16 %v410
        %v923 = vunpack.c.l.b16 %v411
        %v924 = vunpack.c.l.b16 %v412
        %v925 = vunpack.c.l.b16 %v413
        %v926 = vunpack.c.l.b16 %v414
        %v927 = vunpack.c.l.b16 %v415
        %v928 = vunpack.c.l.b16 %v416
        %v929 = vunpack.c.l.b16 %v417
        %v930 = vunpack.c.l.b16 %v418
        %v931 = vpack.c.b16 %v868, %v867
        %v932 = vpack.c.b16 %v870, %v869
        %v933 = vpack.c.b16 %v872, %v871
        %v934 = vpack.c.b16 %v874, %v873
        %v935 = vpack.c.b16 %v876, %v875
        %v936 = vpack.c.b16 %v878, %v877
        %v937 = vpack.c.b16 %v880, %v879
        %v938 = vpack.c.b16 %v882, %v881
        %v939 = vpack.c.b16 %v884, %v883
        %v940 = vpack.c.b16 %v886, %v885
        %v941 = vpack.c.b16 %v888, %v887
        %v942 = vpack.c.b16 %v890, %v889
        %v943 = vpack.c.b16 %v892, %v891
        %v944 = vpack.c.b16 %v894, %v893
        %v945 = vpack.c.b16 %v896, %v895
        %v946 = vpack.c.b16 %v898, %v897
        %v947 = vpack.c.b16 %v900, %v899
        %v948 = vpack.c.b16 %v902, %v901
        %v949 = vpack.c.b16 %v904, %v903
        %v950 = vpack.c.b16 %v906, %v905
        %v951 = vpack.c.b16 %v908, %v907
        %v952 = vpack.c.b16 %v910, %v909
        %v953 = vpack.c.b16 %v912, %v911
        %v954 = vpack.c.b16 %v914, %v913
        %v955 = vpack.c.b16 %v916, %v915
        %v956 = vpack.c.b16 %v918, %v917
        %v957 = vpack.c.b16 %v920, %v919
        %v958 = vpack.c.b16 %v922, %v921
        %v959 = vpack.c.b16 %v924, %v923
        %v960 = vpack.c.b16 %v926, %v925
        %v961 = vpack.c.b16 %v928, %v927
        %v962 = vpack.c.b16 %v930, %v929
        %995 = vmatprep.subr.bf16.mxu0 0
        %996 = vmatpush1.bf16.msra.mxu0 %v931
        %997 = vmatprep.subr.bf16.mxu0 0
        %998 = vmatpush1.bf16.msra.mxu0 %v932
        %999 = vmatprep.subr.bf16.mxu0 0
        %1000 = vmatpush1.bf16.msra.mxu0 %v933
        %1001 = vmatprep.subr.bf16.mxu0 0
        %1002 = vmatpush1.bf16.msra.mxu0 %v934
        %1003 = vmatprep.subr.bf16.mxu0 0
        %1004 = vmatpush1.bf16.msra.mxu0 %v935
        %1005 = vmatprep.subr.bf16.mxu0 0
        %1006 = vmatpush1.bf16.msra.mxu0 %v936
        %1007 = vmatprep.subr.bf16.mxu0 0
        %1008 = vmatpush1.bf16.msra.mxu0 %v937
        %1009 = vmatprep.subr.bf16.mxu0 0
        %1010 = vmatpush1.bf16.msra.mxu0 %v938
        %1011 = vmatprep.subr.bf16.mxu0 0
        %1012 = vmatpush1.bf16.msra.mxu0 %v939
        %1013 = vmatprep.subr.bf16.mxu0 0
        %1014 = vmatpush1.bf16.msra.mxu0 %v940
        %1015 = vmatprep.subr.bf16.mxu0 0
        %1016 = vmatpush1.bf16.msra.mxu0 %v941
        %1017 = vmatprep.subr.bf16.mxu0 0
        %1018 = vmatpush1.bf16.msra.mxu0 %v942
        %1019 = vmatprep.subr.bf16.mxu0 0
        %1020 = vmatpush1.bf16.msra.mxu0 %v943
        %1021 = vmatprep.subr.bf16.mxu0 0
        %1022 = vmatpush1.bf16.msra.mxu0 %v944
        %1023 = vmatprep.subr.bf16.mxu0 0
        %1024 = vmatpush1.bf16.msra.mxu0 %v945
        %1025 = vmatprep.subr.bf16.mxu0 0
        %1026 = vmatpush1.bf16.msra.mxu0 %v946
        %1027 = vmatprep.mubr.bf16.mxu0 %v676
        %1028 = vmatmul.mubr.bf16.gmra.mrb[0].mxu0 %v675
        %v1029 = vpop.f32.mrb[0].mxu0
        %v1030 = vadd.f32 0.0, %v1029
        %v1031 = vpop.f32.mrb[0].mxu0
        %v1032 = vpop.f32.mrb[0].mxu0
        %v1033 = vadd.f32 0.0, %v1032
        %v1034 = vpop.f32.mrb[0].mxu0
        %1035 = vmatprep.mubr.bf16.mxu0 %v680
        %1036 = vmatmul.mubr.bf16.gmra.mrb[0].mxu0 %v679
        %v1037 = vpop.f32.mrb[0].mxu0
        %v1038 = vadd.f32 0.0, %v1037
        %v1039 = vpop.f32.mrb[0].mxu0
        %v1040 = vpop.f32.mrb[0].mxu0
        %v1041 = vadd.f32 0.0, %v1040
        %v1042 = vpop.f32.mrb[0].mxu0
        %1043 = vmatprep.mubr.bf16.mxu0 %v684
        %1044 = vmatmul.mubr.bf16.gmra.mrb[0].mxu0 %v683
        %v1045 = vpop.f32.mrb[0].mxu0
        %v1046 = vadd.f32 0.0, %v1045
        %v1047 = vpop.f32.mrb[0].mxu0
        %v1048 = vpop.f32.mrb[0].mxu0
        %v1049 = vadd.f32 0.0, %v1048
        %v1050 = vpop.f32.mrb[0].mxu0
        %1051 = vmatprep.mubr.bf16.mxu0 %v688
        %1052 = vmatmul.mubr.bf16.gmra.mrb[0].mxu0 %v687
        %v1053 = vpop.f32.mrb[0].mxu0
        %v1054 = vadd.f32 0.0, %v1053
        %v1055 = vpop.f32.mrb[0].mxu0
        %v1056 = vpop.f32.mrb[0].mxu0
        %v1057 = vadd.f32 0.0, %v1056
        %v1058 = vpop.f32.mrb[0].mxu0
        %1059 = vmatprep.mubr.bf16.mxu0 %v692
        %1060 = vmatmul.mubr.bf16.gmra.mrb[0].mxu0 %v691
        %v1061 = vpop.f32.mrb[0].mxu0
        %v1062 = vadd.f32 0.0, %v1061
        %v1063 = vpop.f32.mrb[0].mxu0
        %v1064 = vpop.f32.mrb[0].mxu0
        %v1065 = vadd.f32 0.0, %v1064
        %v1066 = vpop.f32.mrb[0].mxu0
        %1067 = vmatprep.mubr.bf16.mxu0 %v696
        %1068 = vmatmul.mubr.bf16.gmra.mrb[0].mxu0 %v695
        %v1069 = vpop.f32.mrb[0].mxu0
        %v1070 = vadd.f32 0.0, %v1069
        %v1071 = vpop.f32.mrb[0].mxu0
        %v1072 = vpop.f32.mrb[0].mxu0
        %v1073 = vadd.f32 0.0, %v1072
        %v1074 = vpop.f32.mrb[0].mxu0
        %1075 = vmatprep.mubr.bf16.mxu0 %v700
        %1076 = vmatmul.mubr.bf16.gmra.mrb[0].mxu0 %v699
        %v1077 = vpop.f32.mrb[0].mxu0
        %v1078 = vadd.f32 0.0, %v1077
        %v1079 = vpop.f32.mrb[0].mxu0
        %v1080 = vpop.f32.mrb[0].mxu0
        %v1081 = vadd.f32 0.0, %v1080
        %v1082 = vpop.f32.mrb[0].mxu0
        %1083 = vmatprep.mubr.bf16.mxu0 %v704
        %1084 = vmatmul.mubr.bf16.gmra.mrb[0].mxu0 %v703
        %v1085 = vpop.f32.mrb[0].mxu0
        %v1086 = vadd.f32 0.0, %v1085
        %v1087 = vpop.f32.mrb[0].mxu0
        %v1088 = vpop.f32.mrb[0].mxu0
        %v1089 = vadd.f32 0.0, %v1088
        %v1090 = vpop.f32.mrb[0].mxu0
        %1091 = vmatprep.mubr.bf16.mxu0 %v708
        %1092 = vmatmul.mubr.bf16.gmra.mrb[0].mxu0 %v707
        %v1093 = vpop.f32.mrb[0].mxu0
        %v1094 = vadd.f32 0.0, %v1093
        %v1095 = vpop.f32.mrb[0].mxu0
        %v1096 = vpop.f32.mrb[0].mxu0
        %v1097 = vadd.f32 0.0, %v1096
        %v1098 = vpop.f32.mrb[0].mxu0
        %1099 = vmatprep.mubr.bf16.mxu0 %v712
        %1100 = vmatmul.mubr.bf16.gmra.mrb[0].mxu0 %v711
        %v1101 = vpop.f32.mrb[0].mxu0
        %v1102 = vadd.f32 0.0, %v1101
        %v1103 = vpop.f32.mrb[0].mxu0
        %v1104 = vpop.f32.mrb[0].mxu0
        %v1105 = vadd.f32 0.0, %v1104
        %v1106 = vpop.f32.mrb[0].mxu0
        %1107 = vmatprep.mubr.bf16.mxu0 %v716
        %1108 = vmatmul.mubr.bf16.gmra.mrb[0].mxu0 %v715
        %v1109 = vpop.f32.mrb[0].mxu0
        %v1110 = vadd.f32 0.0, %v1109
        %v1111 = vpop.f32.mrb[0].mxu0
        %v1112 = vpop.f32.mrb[0].mxu0
        %v1113 = vadd.f32 0.0, %v1112
        %v1114 = vpop.f32.mrb[0].mxu0
        %1115 = vmatprep.mubr.bf16.mxu0 %v720
        %1116 = vmatmul.mubr.bf16.gmra.mrb[0].mxu0 %v719
        %v1117 = vpop.f32.mrb[0].mxu0
        %v1118 = vadd.f32 0.0, %v1117
        %v1119 = vpop.f32.mrb[0].mxu0
        %v1120 = vpop.f32.mrb[0].mxu0
        %v1121 = vadd.f32 0.0, %v1120
        %v1122 = vpop.f32.mrb[0].mxu0
        %1123 = vmatprep.mubr.bf16.mxu0 %v724
        %1124 = vmatmul.mubr.bf16.gmra.mrb[0].mxu0 %v723
        %v1125 = vpop.f32.mrb[0].mxu0
        %v1126 = vadd.f32 0.0, %v1125
        %v1127 = vpop.f32.mrb[0].mxu0
        %v1128 = vpop.f32.mrb[0].mxu0
        %v1129 = vadd.f32 0.0, %v1128
        %v1130 = vpop.f32.mrb[0].mxu0
        %1131 = vmatprep.mubr.bf16.mxu0 %v728
        %1132 = vmatmul.mubr.bf16.gmra.mrb[0].mxu0 %v727
        %v1133 = vpop.f32.mrb[0].mxu0
        %v1134 = vadd.f32 0.0, %v1133
        %v1135 = vpop.f32.mrb[0].mxu0
        %v1136 = vpop.f32.mrb[0].mxu0
        %v1137 = vadd.f32 0.0, %v1136
        %v1138 = vpop.f32.mrb[0].mxu0
        %1139 = vmatprep.mubr.bf16.mxu0 %v732
        %1140 = vmatmul.mubr.bf16.gmra.mrb[0].mxu0 %v731
        %v1141 = vpop.f32.mrb[0].mxu0
        %v1142 = vadd.f32 0.0, %v1141
        %v1143 = vpop.f32.mrb[0].mxu0
        %v1144 = vpop.f32.mrb[0].mxu0
        %v1145 = vadd.f32 0.0, %v1144
        %v1146 = vpop.f32.mrb[0].mxu0
        %1147 = vmatprep.mubr.bf16.mxu0 %v736
        %1148 = vmatmul.mubr.bf16.gmra.mrb[0].mxu0 %v735
        %v1149 = vpop.f32.mrb[0].mxu0
        %v1150 = vadd.f32 0.0, %v1149
        %v1151 = vpop.f32.mrb[0].mxu0
        %v1152 = vpop.f32.mrb[0].mxu0
        %v1153 = vadd.f32 0.0, %v1152
        %v1154 = vpop.f32.mrb[0].mxu0
        %1155 = vdwg.mxu0
        %1156 = vmatprep.subr.bf16.mxu0 0
        %1157 = vmatpush1.bf16.msra.mxu0 %v947
        %1158 = vmatprep.subr.bf16.mxu0 0
        %1159 = vmatpush1.bf16.msra.mxu0 %v948
        %1160 = vmatprep.subr.bf16.mxu0 0
        %1161 = vmatpush1.bf16.msra.mxu0 %v949
        %1162 = vmatprep.subr.bf16.mxu0 0
        %1163 = vmatpush1.bf16.msra.mxu0 %v950
        %1164 = vmatprep.subr.bf16.mxu0 0
        %1165 = vmatpush1.bf16.msra.mxu0 %v951
        %1166 = vmatprep.subr.bf16.mxu0 0
        %1167 = vmatpush1.bf16.msra.mxu0 %v952
        %1168 = vmatprep.subr.bf16.mxu0 0
        %1169 = vmatpush1.bf16.msra.mxu0 %v953
        %1170 = vmatprep.subr.bf16.mxu0 0
        %1171 = vmatpush1.bf16.msra.mxu0 %v954
        %1172 = vmatprep.subr.bf16.mxu0 0
        %1173 = vmatpush1.bf16.msra.mxu0 %v955
        %1174 = vmatprep.subr.bf16.mxu0 0
        %1175 = vmatpush1.bf16.msra.mxu0 %v956
        %1176 = vmatprep.subr.bf16.mxu0 0
        %1177 = vmatpush1.bf16.msra.mxu0 %v957
        %1178 = vmatprep.subr.bf16.mxu0 0
        %1179 = vmatpush1.bf16.msra.mxu0 %v958
        %1180 = vmatprep.subr.bf16.mxu0 0
        %1181 = vmatpush1.bf16.msra.mxu0 %v959
        %1182 = vmatprep.subr.bf16.mxu0 0
        %1183 = vmatpush1.bf16.msra.mxu0 %v960
        %1184 = vmatprep.subr.bf16.mxu0 0
        %1185 = vmatpush1.bf16.msra.mxu0 %v961
        %1186 = vmatprep.subr.bf16.mxu0 0
        %1187 = vmatpush1.bf16.msra.mxu0 %v962
        %1188 = vmatprep.mubr.bf16.mxu0 %v678
        %1189 = vmatmul.mubr.bf16.gmra.mrb[0].mxu0 %v677
        %v1190 = vpop.f32.mrb[0].mxu0
        %v1191 = vadd.f32 %v1030, %v1190
        %v1192 = vpop.f32.mrb[0].mxu0
        %v1193 = vpop.f32.mrb[0].mxu0
        %v1194 = vadd.f32 %v1033, %v1193
        %v1195 = vpop.f32.mrb[0].mxu0
        %1196 = vmatprep.mubr.bf16.mxu0 %v682
        %1197 = vmatmul.mubr.bf16.gmra.mrb[0].mxu0 %v681
        %v1198 = vpop.f32.mrb[0].mxu0
        %v1199 = vadd.f32 %v1038, %v1198
        %v1200 = vpop.f32.mrb[0].mxu0
        %v1201 = vpop.f32.mrb[0].mxu0
        %v1202 = vadd.f32 %v1041, %v1201
        %v1203 = vpop.f32.mrb[0].mxu0
        %1204 = vmatprep.mubr.bf16.mxu0 %v686
        %1205 = vmatmul.mubr.bf16.gmra.mrb[0].mxu0 %v685
        %v1206 = vpop.f32.mrb[0].mxu0
        %v1207 = vadd.f32 %v1046, %v1206
        %v1208 = vpop.f32.mrb[0].mxu0
        %v1209 = vpop.f32.mrb[0].mxu0
        %v1210 = vadd.f32 %v1049, %v1209
        %v1211 = vpop.f32.mrb[0].mxu0
        %1212 = vmatprep.mubr.bf16.mxu0 %v690
        %1213 = vmatmul.mubr.bf16.gmra.mrb[0].mxu0 %v689
        %v1214 = vpop.f32.mrb[0].mxu0
        %v1215 = vadd.f32 %v1054, %v1214
        %v1216 = vpop.f32.mrb[0].mxu0
        %v1217 = vpop.f32.mrb[0].mxu0
        %v1218 = vadd.f32 %v1057, %v1217
        %v1219 = vpop.f32.mrb[0].mxu0
        %1220 = vmatprep.mubr.bf16.mxu0 %v694
        %1221 = vmatmul.mubr.bf16.gmra.mrb[0].mxu0 %v693
        %v1222 = vpop.f32.mrb[0].mxu0
        %v1223 = vadd.f32 %v1062, %v1222
        %v1224 = vpop.f32.mrb[0].mxu0
        %v1225 = vpop.f32.mrb[0].mxu0
        %v1226 = vadd.f32 %v1065, %v1225
        %v1227 = vpop.f32.mrb[0].mxu0
        %1228 = vmatprep.mubr.bf16.mxu0 %v698
        %1229 = vmatmul.mubr.bf16.gmra.mrb[0].mxu0 %v697
        %v1230 = vpop.f32.mrb[0].mxu0
        %v1231 = vadd.f32 %v1070, %v1230
        %v1232 = vpop.f32.mrb[0].mxu0
        %v1233 = vpop.f32.mrb[0].mxu0
        %v1234 = vadd.f32 %v1073, %v1233
        %v1235 = vpop.f32.mrb[0].mxu0
        %1236 = vmatprep.mubr.bf16.mxu0 %v702
        %1237 = vmatmul.mubr.bf16.gmra.mrb[0].mxu0 %v701
        %v1238 = vpop.f32.mrb[0].mxu0
        %v1239 = vadd.f32 %v1078, %v1238
        %v1240 = vpop.f32.mrb[0].mxu0
        %v1241 = vpop.f32.mrb[0].mxu0
        %v1242 = vadd.f32 %v1081, %v1241
        %v1243 = vpop.f32.mrb[0].mxu0
        %1244 = vmatprep.mubr.bf16.mxu0 %v706
        %1245 = vmatmul.mubr.bf16.gmra.mrb[0].mxu0 %v705
        %v1246 = vpop.f32.mrb[0].mxu0
        %v1247 = vadd.f32 %v1086, %v1246
        %v1248 = vpop.f32.mrb[0].mxu0
        %v1249 = vpop.f32.mrb[0].mxu0
        %v1250 = vadd.f32 %v1089, %v1249
        %v1251 = vpop.f32.mrb[0].mxu0
        %1252 = vmatprep.mubr.bf16.mxu0 %v710
        %1253 = vmatmul.mubr.bf16.gmra.mrb[0].mxu0 %v709
        %v1254 = vpop.f32.mrb[0].mxu0
        %v1255 = vadd.f32 %v1094, %v1254
        %v1256 = vpop.f32.mrb[0].mxu0
        %v1257 = vpop.f32.mrb[0].mxu0
        %v1258 = vadd.f32 %v1097, %v1257
        %v1259 = vpop.f32.mrb[0].mxu0
        %1260 = vmatprep.mubr.bf16.mxu0 %v714
        %1261 = vmatmul.mubr.bf16.gmra.mrb[0].mxu0 %v713
        %v1262 = vpop.f32.mrb[0].mxu0
        %v1263 = vadd.f32 %v1102, %v1262
        %v1264 = vpop.f32.mrb[0].mxu0
        %v1265 = vpop.f32.mrb[0].mxu0
        %v1266 = vadd.f32 %v1105, %v1265
        %v1267 = vpop.f32.mrb[0].mxu0
        %1268 = vmatprep.mubr.bf16.mxu0 %v718
        %1269 = vmatmul.mubr.bf16.gmra.mrb[0].mxu0 %v717
        %v1270 = vpop.f32.mrb[0].mxu0
        %v1271 = vadd.f32 %v1110, %v1270
        %v1272 = vpop.f32.mrb[0].mxu0
        %v1273 = vpop.f32.mrb[0].mxu0
        %v1274 = vadd.f32 %v1113, %v1273
        %v1275 = vpop.f32.mrb[0].mxu0
        %1276 = vmatprep.mubr.bf16.mxu0 %v722
        %1277 = vmatmul.mubr.bf16.gmra.mrb[0].mxu0 %v721
        %v1278 = vpop.f32.mrb[0].mxu0
        %v1279 = vadd.f32 %v1118, %v1278
        %v1280 = vpop.f32.mrb[0].mxu0
        %v1281 = vpop.f32.mrb[0].mxu0
        %v1282 = vadd.f32 %v1121, %v1281
        %v1283 = vpop.f32.mrb[0].mxu0
        %1284 = vmatprep.mubr.bf16.mxu0 %v726
        %1285 = vmatmul.mubr.bf16.gmra.mrb[0].mxu0 %v725
        %v1286 = vpop.f32.mrb[0].mxu0
        %v1287 = vadd.f32 %v1126, %v1286
        %v1288 = vpop.f32.mrb[0].mxu0
        %v1289 = vpop.f32.mrb[0].mxu0
        %v1290 = vadd.f32 %v1129, %v1289
        %v1291 = vpop.f32.mrb[0].mxu0
        %1292 = vmatprep.mubr.bf16.mxu0 %v730
        %1293 = vmatmul.mubr.bf16.gmra.mrb[0].mxu0 %v729
        %v1294 = vpop.f32.mrb[0].mxu0
        %v1295 = vadd.f32 %v1134, %v1294
        %v1296 = vpop.f32.mrb[0].mxu0
        %v1297 = vpop.f32.mrb[0].mxu0
        %v1298 = vadd.f32 %v1137, %v1297
        %v1299 = vpop.f32.mrb[0].mxu0
        %1300 = vmatprep.mubr.bf16.mxu0 %v734
        %1301 = vmatmul.mubr.bf16.gmra.mrb[0].mxu0 %v733
        %v1302 = vpop.f32.mrb[0].mxu0
        %v1303 = vadd.f32 %v1142, %v1302
        %v1304 = vpop.f32.mrb[0].mxu0
        %v1305 = vpop.f32.mrb[0].mxu0
        %v1306 = vadd.f32 %v1145, %v1305
        %v1307 = vpop.f32.mrb[0].mxu0
        %1308 = vmatprep.mubr.bf16.mxu0 %v738
        %1309 = vmatmul.mubr.bf16.gmra.mrb[0].mxu0 %v737
        %v1310 = vpop.f32.mrb[0].mxu0
        %v1311 = vadd.f32 %v1150, %v1310
        %v1312 = vpop.f32.mrb[0].mxu0
        %v1313 = vpop.f32.mrb[0].mxu0
        %v1314 = vadd.f32 %v1153, %v1313
        %v1315 = vpop.f32.mrb[0].mxu0
        %1316 = vdwg.mxu0
        %v1317 = vld [vmem:[%s274] sm:$0xff]
        %v1318 = vld [vmem:[%s274 + $0x8] sm:$0xff]
        %v1319 = vld [vmem:[%s274 + $0x10] sm:$0xff]
        %v1320 = vld [vmem:[%s274 + $0x18] sm:$0xff]
        %v1321 = vld [vmem:[%s274 + $0x20] sm:$0xff]
        %v1322 = vld [vmem:[%s274 + $0x28] sm:$0xff]
        %v1323 = vld [vmem:[%s274 + $0x30] sm:$0xff]
        %v1324 = vld [vmem:[%s274 + $0x38] sm:$0xff]
        %v1325 = vld [vmem:[%s274 + $0x40] sm:$0xff]
        %v1326 = vld [vmem:[%s274 + $0x48] sm:$0xff]
        %v1327 = vld [vmem:[%s274 + $0x50] sm:$0xff]
        %v1328 = vld [vmem:[%s274 + $0x58] sm:$0xff]
        %v1329 = vld [vmem:[%s274 + $0x60] sm:$0xff]
        %v1330 = vld [vmem:[%s274 + $0x68] sm:$0xff]
        %v1331 = vld [vmem:[%s274 + $0x70] sm:$0xff]
        %v1332 = vld [vmem:[%s274 + $0x78] sm:$0xff]
        %v1333 = vld [vmem:[%s274 + $0x80] sm:$0xff]
        %v1334 = vld [vmem:[%s274 + $0x88] sm:$0xff]
        %v1335 = vld [vmem:[%s274 + $0x90] sm:$0xff]
        %v1336 = vld [vmem:[%s274 + $0x98] sm:$0xff]
        %v1337 = vld [vmem:[%s274 + $0xa0] sm:$0xff]
        %v1338 = vld [vmem:[%s274 + $0xa8] sm:$0xff]
        %v1339 = vld [vmem:[%s274 + $0xb0] sm:$0xff]
        %v1340 = vld [vmem:[%s274 + $0xb8] sm:$0xff]
        %v1341 = vld [vmem:[%s274 + $0xc0] sm:$0xff]
        %v1342 = vld [vmem:[%s274 + $0xc8] sm:$0xff]
        %v1343 = vld [vmem:[%s274 + $0xd0] sm:$0xff]
        %v1344 = vld [vmem:[%s274 + $0xd8] sm:$0xff]
        %v1345 = vld [vmem:[%s274 + $0xe0] sm:$0xff]
        %v1346 = vld [vmem:[%s274 + $0xe8] sm:$0xff]
        %v1347 = vld [vmem:[%s274 + $0xf0] sm:$0xff]
        %v1348 = vld [vmem:[%s274 + $0xf8] sm:$0xff]
        %v1349 = vld [vmem:[%s274 + $0x100] sm:$0xff]
        %v1350 = vld [vmem:[%s274 + $0x108] sm:$0xff]
        %v1351 = vld [vmem:[%s274 + $0x110] sm:$0xff]
        %v1352 = vld [vmem:[%s274 + $0x118] sm:$0xff]
        %v1353 = vld [vmem:[%s274 + $0x120] sm:$0xff]
        %v1354 = vld [vmem:[%s274 + $0x128] sm:$0xff]
        %v1355 = vld [vmem:[%s274 + $0x130] sm:$0xff]
        %v1356 = vld [vmem:[%s274 + $0x138] sm:$0xff]
        %v1357 = vld [vmem:[%s274 + $0x140] sm:$0xff]
        %v1358 = vld [vmem:[%s274 + $0x148] sm:$0xff]
        %v1359 = vld [vmem:[%s274 + $0x150] sm:$0xff]
        %v1360 = vld [vmem:[%s274 + $0x158] sm:$0xff]
        %v1361 = vld [vmem:[%s274 + $0x160] sm:$0xff]
        %v1362 = vld [vmem:[%s274 + $0x168] sm:$0xff]
        %v1363 = vld [vmem:[%s274 + $0x170] sm:$0xff]
        %v1364 = vld [vmem:[%s274 + $0x178] sm:$0xff]
        %v1365 = vld [vmem:[%s274 + $0x180] sm:$0xff]
        %v1366 = vld [vmem:[%s274 + $0x188] sm:$0xff]
        %v1367 = vld [vmem:[%s274 + $0x190] sm:$0xff]
        %v1368 = vld [vmem:[%s274 + $0x198] sm:$0xff]
        %v1369 = vld [vmem:[%s274 + $0x1a0] sm:$0xff]
        %v1370 = vld [vmem:[%s274 + $0x1a8] sm:$0xff]
        %v1371 = vld [vmem:[%s274 + $0x1b0] sm:$0xff]
        %v1372 = vld [vmem:[%s274 + $0x1b8] sm:$0xff]
        %v1373 = vld [vmem:[%s274 + $0x1c0] sm:$0xff]
        %v1374 = vld [vmem:[%s274 + $0x1c8] sm:$0xff]
        %v1375 = vld [vmem:[%s274 + $0x1d0] sm:$0xff]
        %v1376 = vld [vmem:[%s274 + $0x1d8] sm:$0xff]
        %v1377 = vld [vmem:[%s274 + $0x1e0] sm:$0xff]
        %v1378 = vld [vmem:[%s274 + $0x1e8] sm:$0xff]
        %v1379 = vld [vmem:[%s274 + $0x1f0] sm:$0xff]
        %v1380 = vld [vmem:[%s274 + $0x1f8] sm:$0xff]
        %v1445 = vunpack.c.l.b16 %v1317
        %v1446 = vunpack.c.h.b16 %v1317
        %v1447 = vunpack.c.l.b16 %v1318
        %v1448 = vunpack.c.h.b16 %v1318
        %v1449 = vunpack.c.l.b16 %v1319
        %v1450 = vunpack.c.h.b16 %v1319
        %v1451 = vunpack.c.l.b16 %v1320
        %v1452 = vunpack.c.h.b16 %v1320
        %v1453 = vunpack.c.l.b16 %v1321
        %v1454 = vunpack.c.h.b16 %v1321
        %v1455 = vunpack.c.l.b16 %v1322
        %v1456 = vunpack.c.h.b16 %v1322
        %v1457 = vunpack.c.l.b16 %v1323
        %v1458 = vunpack.c.h.b16 %v1323
        %v1459 = vunpack.c.l.b16 %v1324
        %v1460 = vunpack.c.h.b16 %v1324
        %v1461 = vunpack.c.l.b16 %v1325
        %v1462 = vunpack.c.h.b16 %v1325
        %v1463 = vunpack.c.l.b16 %v1326
        %v1464 = vunpack.c.h.b16 %v1326
        %v1465 = vunpack.c.l.b16 %v1327
        %v1466 = vunpack.c.h.b16 %v1327
        %v1467 = vunpack.c.l.b16 %v1328
        %v1468 = vunpack.c.h.b16 %v1328
        %v1469 = vunpack.c.l.b16 %v1329
        %v1470 = vunpack.c.h.b16 %v1329
        %v1471 = vunpack.c.l.b16 %v1330
        %v1472 = vunpack.c.h.b16 %v1330
        %v1473 = vunpack.c.l.b16 %v1331
        %v1474 = vunpack.c.h.b16 %v1331
        %v1475 = vunpack.c.l.b16 %v1332
        %v1476 = vunpack.c.h.b16 %v1332
        %v1477 = vunpack.c.l.b16 %v1333
        %v1478 = vunpack.c.h.b16 %v1333
        %v1479 = vunpack.c.l.b16 %v1334
        %v1480 = vunpack.c.h.b16 %v1334
        %v1481 = vunpack.c.l.b16 %v1335
        %v1482 = vunpack.c.h.b16 %v1335
        %v1483 = vunpack.c.l.b16 %v1336
        %v1484 = vunpack.c.h.b16 %v1336
        %v1485 = vunpack.c.l.b16 %v1337
        %v1486 = vunpack.c.h.b16 %v1337
        %v1487 = vunpack.c.l.b16 %v1338
        %v1488 = vunpack.c.h.b16 %v1338
        %v1489 = vunpack.c.l.b16 %v1339
        %v1490 = vunpack.c.h.b16 %v1339
        %v1491 = vunpack.c.l.b16 %v1340
        %v1492 = vunpack.c.h.b16 %v1340
        %v1493 = vunpack.c.l.b16 %v1341
        %v1494 = vunpack.c.h.b16 %v1341
        %v1495 = vunpack.c.l.b16 %v1342
        %v1496 = vunpack.c.h.b16 %v1342
        %v1497 = vunpack.c.l.b16 %v1343
        %v1498 = vunpack.c.h.b16 %v1343
        %v1499 = vunpack.c.l.b16 %v1344
        %v1500 = vunpack.c.h.b16 %v1344
        %v1501 = vunpack.c.l.b16 %v1345
        %v1502 = vunpack.c.h.b16 %v1345
        %v1503 = vunpack.c.l.b16 %v1346
        %v1504 = vunpack.c.h.b16 %v1346
        %v1505 = vunpack.c.l.b16 %v1347
        %v1506 = vunpack.c.h.b16 %v1347
        %v1507 = vunpack.c.l.b16 %v1348
        %v1508 = vunpack.c.h.b16 %v1348
        %v1509 = vunpack.c.l.b16 %v1349
        %v1510 = vunpack.c.h.b16 %v1349
        %v1511 = vunpack.c.l.b16 %v1350
        %v1512 = vunpack.c.h.b16 %v1350
        %v1513 = vunpack.c.l.b16 %v1351
        %v1514 = vunpack.c.h.b16 %v1351
        %v1515 = vunpack.c.l.b16 %v1352
        %v1516 = vunpack.c.h.b16 %v1352
        %v1517 = vunpack.c.l.b16 %v1353
        %v1518 = vunpack.c.h.b16 %v1353
        %v1519 = vunpack.c.l.b16 %v1354
        %v1520 = vunpack.c.h.b16 %v1354
        %v1521 = vunpack.c.l.b16 %v1355
        %v1522 = vunpack.c.h.b16 %v1355
        %v1523 = vunpack.c.l.b16 %v1356
        %v1524 = vunpack.c.h.b16 %v1356
        %v1525 = vunpack.c.l.b16 %v1357
        %v1526 = vunpack.c.h.b16 %v1357
        %v1527 = vunpack.c.l.b16 %v1358
        %v1528 = vunpack.c.h.b16 %v1358
        %v1529 = vunpack.c.l.b16 %v1359
        %v1530 = vunpack.c.h.b16 %v1359
        %v1531 = vunpack.c.l.b16 %v1360
        %v1532 = vunpack.c.h.b16 %v1360
        %v1533 = vunpack.c.l.b16 %v1361
        %v1534 = vunpack.c.h.b16 %v1361
        %v1535 = vunpack.c.l.b16 %v1362
        %v1536 = vunpack.c.h.b16 %v1362
        %v1537 = vunpack.c.l.b16 %v1363
        %v1538 = vunpack.c.h.b16 %v1363
        %v1539 = vunpack.c.l.b16 %v1364
        %v1540 = vunpack.c.h.b16 %v1364
        %v1541 = vunpack.c.l.b16 %v1365
        %v1542 = vunpack.c.h.b16 %v1365
        %v1543 = vunpack.c.l.b16 %v1366
        %v1544 = vunpack.c.h.b16 %v1366
        %v1545 = vunpack.c.l.b16 %v1367
        %v1546 = vunpack.c.h.b16 %v1367
        %v1547 = vunpack.c.l.b16 %v1368
        %v1548 = vunpack.c.h.b16 %v1368
        %v1549 = vunpack.c.l.b16 %v1369
        %v1550 = vunpack.c.h.b16 %v1369
        %v1551 = vunpack.c.l.b16 %v1370
        %v1552 = vunpack.c.h.b16 %v1370
        %v1553 = vunpack.c.l.b16 %v1371
        %v1554 = vunpack.c.h.b16 %v1371
        %v1555 = vunpack.c.l.b16 %v1372
        %v1556 = vunpack.c.h.b16 %v1372
        %v1557 = vunpack.c.l.b16 %v1373
        %v1558 = vunpack.c.h.b16 %v1373
        %v1559 = vunpack.c.l.b16 %v1374
        %v1560 = vunpack.c.h.b16 %v1374
        %v1561 = vunpack.c.l.b16 %v1375
        %v1562 = vunpack.c.h.b16 %v1375
        %v1563 = vunpack.c.l.b16 %v1376
        %v1564 = vunpack.c.h.b16 %v1376
        %v1565 = vunpack.c.l.b16 %v1377
        %v1566 = vunpack.c.h.b16 %v1377
        %v1567 = vunpack.c.l.b16 %v1378
        %v1568 = vunpack.c.h.b16 %v1378
        %v1569 = vunpack.c.l.b16 %v1379
        %v1570 = vunpack.c.h.b16 %v1379
        %v1571 = vunpack.c.l.b16 %v1380
        %v1572 = vunpack.c.h.b16 %v1380
        %v1573 = vpack.c.b16 %v1449, %v1445
        %v1574 = vpack.c.b16 %v1450, %v1446
        %v1575 = vpack.c.b16 %v1451, %v1447
        %v1576 = vpack.c.b16 %v1452, %v1448
        %v1577 = vpack.c.b16 %v1457, %v1453
        %v1578 = vpack.c.b16 %v1458, %v1454
        %v1579 = vpack.c.b16 %v1459, %v1455
        %v1580 = vpack.c.b16 %v1460, %v1456
        %v1581 = vpack.c.b16 %v1465, %v1461
        %v1582 = vpack.c.b16 %v1466, %v1462
        %v1583 = vpack.c.b16 %v1467, %v1463
        %v1584 = vpack.c.b16 %v1468, %v1464
        %v1585 = vpack.c.b16 %v1473, %v1469
        %v1586 = vpack.c.b16 %v1474, %v1470
        %v1587 = vpack.c.b16 %v1475, %v1471
        %v1588 = vpack.c.b16 %v1476, %v1472
        %v1589 = vpack.c.b16 %v1481, %v1477
        %v1590 = vpack.c.b16 %v1482, %v1478
        %v1591 = vpack.c.b16 %v1483, %v1479
        %v1592 = vpack.c.b16 %v1484, %v1480
        %v1593 = vpack.c.b16 %v1489, %v1485
        %v1594 = vpack.c.b16 %v1490, %v1486
        %v1595 = vpack.c.b16 %v1491, %v1487
        %v1596 = vpack.c.b16 %v1492, %v1488
        %v1597 = vpack.c.b16 %v1497, %v1493
        %v1598 = vpack.c.b16 %v1498, %v1494
        %v1599 = vpack.c.b16 %v1499, %v1495
        %v1600 = vpack.c.b16 %v1500, %v1496
        %v1601 = vpack.c.b16 %v1505, %v1501
        %v1602 = vpack.c.b16 %v1506, %v1502
        %v1603 = vpack.c.b16 %v1507, %v1503
        %v1604 = vpack.c.b16 %v1508, %v1504
        %v1605 = vpack.c.b16 %v1513, %v1509
        %v1606 = vpack.c.b16 %v1514, %v1510
        %v1607 = vpack.c.b16 %v1515, %v1511
        %v1608 = vpack.c.b16 %v1516, %v1512
        %v1609 = vpack.c.b16 %v1521, %v1517
        %v1610 = vpack.c.b16 %v1522, %v1518
        %v1611 = vpack.c.b16 %v1523, %v1519
        %v1612 = vpack.c.b16 %v1524, %v1520
        %v1613 = vpack.c.b16 %v1529, %v1525
        %v1614 = vpack.c.b16 %v1530, %v1526
        %v1615 = vpack.c.b16 %v1531, %v1527
        %v1616 = vpack.c.b16 %v1532, %v1528
        %v1617 = vpack.c.b16 %v1537, %v1533
        %v1618 = vpack.c.b16 %v1538, %v1534
        %v1619 = vpack.c.b16 %v1539, %v1535
        %v1620 = vpack.c.b16 %v1540, %v1536
        %v1621 = vpack.c.b16 %v1545, %v1541
        %v1622 = vpack.c.b16 %v1546, %v1542
        %v1623 = vpack.c.b16 %v1547, %v1543
        %v1624 = vpack.c.b16 %v1548, %v1544
        %v1625 = vpack.c.b16 %v1553, %v1549
        %v1626 = vpack.c.b16 %v1554, %v1550
        %v1627 = vpack.c.b16 %v1555, %v1551
        %v1628 = vpack.c.b16 %v1556, %v1552
        %v1629 = vpack.c.b16 %v1561, %v1557
        %v1630 = vpack.c.b16 %v1562, %v1558
        %v1631 = vpack.c.b16 %v1563, %v1559
        %v1632 = vpack.c.b16 %v1564, %v1560
        %v1633 = vpack.c.b16 %v1569, %v1565
        %v1634 = vpack.c.b16 %v1570, %v1566
        %v1635 = vpack.c.b16 %v1571, %v1567
        %v1636 = vpack.c.b16 %v1572, %v1568
        %1701 = vmatprep.subr.bf16.mxu0 0
        %1702 = vmatpush1.bf16.msra.mxu0 %v931
        %1703 = vmatprep.subr.bf16.mxu0 0
        %1704 = vmatpush1.bf16.msra.mxu0 %v932
        %1705 = vmatprep.subr.bf16.mxu0 0
        %1706 = vmatpush1.bf16.msra.mxu0 %v933
        %1707 = vmatprep.subr.bf16.mxu0 0
        %1708 = vmatpush1.bf16.msra.mxu0 %v934
        %1709 = vmatprep.subr.bf16.mxu0 0
        %1710 = vmatpush1.bf16.msra.mxu0 %v935
        %1711 = vmatprep.subr.bf16.mxu0 0
        %1712 = vmatpush1.bf16.msra.mxu0 %v936
        %1713 = vmatprep.subr.bf16.mxu0 0
        %1714 = vmatpush1.bf16.msra.mxu0 %v937
        %1715 = vmatprep.subr.bf16.mxu0 0
        %1716 = vmatpush1.bf16.msra.mxu0 %v938
        %1717 = vmatprep.subr.bf16.mxu0 0
        %1718 = vmatpush1.bf16.msra.mxu0 %v939
        %1719 = vmatprep.subr.bf16.mxu0 0
        %1720 = vmatpush1.bf16.msra.mxu0 %v940
        %1721 = vmatprep.subr.bf16.mxu0 0
        %1722 = vmatpush1.bf16.msra.mxu0 %v941
        %1723 = vmatprep.subr.bf16.mxu0 0
        %1724 = vmatpush1.bf16.msra.mxu0 %v942
        %1725 = vmatprep.subr.bf16.mxu0 0
        %1726 = vmatpush1.bf16.msra.mxu0 %v943
        %1727 = vmatprep.subr.bf16.mxu0 0
        %1728 = vmatpush1.bf16.msra.mxu0 %v944
        %1729 = vmatprep.subr.bf16.mxu0 0
        %1730 = vmatpush1.bf16.msra.mxu0 %v945
        %1731 = vmatprep.subr.bf16.mxu0 0
        %1732 = vmatpush1.bf16.msra.mxu0 %v946
        %1733 = vmatprep.mubr.bf16.mxu0 %v1574
        %1734 = vmatmul.mubr.bf16.gmra.mrb[0].mxu0 %v1573
        %v1735 = vpop.f32.mrb[0].mxu0
        %v1736 = vadd.f32 0.0, %v1735
        %v1737 = vpop.f32.mrb[0].mxu0
        %v1738 = vpop.f32.mrb[0].mxu0
        %v1739 = vadd.f32 0.0, %v1738
        %v1740 = vpop.f32.mrb[0].mxu0
        %1741 = vmatprep.mubr.bf16.mxu0 %v1578
        %1742 = vmatmul.mubr.bf16.gmra.mrb[0].mxu0 %v1577
        %v1743 = vpop.f32.mrb[0].mxu0
        %v1744 = vadd.f32 0.0, %v1743
        %v1745 = vpop.f32.mrb[0].mxu0
        %v1746 = vpop.f32.mrb[0].mxu0
        %v1747 = vadd.f32 0.0, %v1746
        %v1748 = vpop.f32.mrb[0].mxu0
        %1749 = vmatprep.mubr.bf16.mxu0 %v1582
        %1750 = vmatmul.mubr.bf16.gmra.mrb[0].mxu0 %v1581
        %v1751 = vpop.f32.mrb[0].mxu0
        %v1752 = vadd.f32 0.0, %v1751
        %v1753 = vpop.f32.mrb[0].mxu0
        %v1754 = vpop.f32.mrb[0].mxu0
        %v1755 = vadd.f32 0.0, %v1754
        %v1756 = vpop.f32.mrb[0].mxu0
        %1757 = vmatprep.mubr.bf16.mxu0 %v1586
        %1758 = vmatmul.mubr.bf16.gmra.mrb[0].mxu0 %v1585
        %v1759 = vpop.f32.mrb[0].mxu0
        %v1760 = vadd.f32 0.0, %v1759
        %v1761 = vpop.f32.mrb[0].mxu0
        %v1762 = vpop.f32.mrb[0].mxu0
        %v1763 = vadd.f32 0.0, %v1762
        %v1764 = vpop.f32.mrb[0].mxu0
        %1765 = vmatprep.mubr.bf16.mxu0 %v1590
        %1766 = vmatmul.mubr.bf16.gmra.mrb[0].mxu0 %v1589
        %v1767 = vpop.f32.mrb[0].mxu0
        %v1768 = vadd.f32 0.0, %v1767
        %v1769 = vpop.f32.mrb[0].mxu0
        %v1770 = vpop.f32.mrb[0].mxu0
        %v1771 = vadd.f32 0.0, %v1770
        %v1772 = vpop.f32.mrb[0].mxu0
        %1773 = vmatprep.mubr.bf16.mxu0 %v1594
        %1774 = vmatmul.mubr.bf16.gmra.mrb[0].mxu0 %v1593
        %v1775 = vpop.f32.mrb[0].mxu0
        %v1776 = vadd.f32 0.0, %v1775
        %v1777 = vpop.f32.mrb[0].mxu0
        %v1778 = vpop.f32.mrb[0].mxu0
        %v1779 = vadd.f32 0.0, %v1778
        %v1780 = vpop.f32.mrb[0].mxu0
        %1781 = vmatprep.mubr.bf16.mxu0 %v1598
        %1782 = vmatmul.mubr.bf16.gmra.mrb[0].mxu0 %v1597
        %v1783 = vpop.f32.mrb[0].mxu0
        %v1784 = vadd.f32 0.0, %v1783
        %v1785 = vpop.f32.mrb[0].mxu0
        %v1786 = vpop.f32.mrb[0].mxu0
        %v1787 = vadd.f32 0.0, %v1786
        %v1788 = vpop.f32.mrb[0].mxu0
        %1789 = vmatprep.mubr.bf16.mxu0 %v1602
        %1790 = vmatmul.mubr.bf16.gmra.mrb[0].mxu0 %v1601
        %v1791 = vpop.f32.mrb[0].mxu0
        %v1792 = vadd.f32 0.0, %v1791
        %v1793 = vpop.f32.mrb[0].mxu0
        %v1794 = vpop.f32.mrb[0].mxu0
        %v1795 = vadd.f32 0.0, %v1794
        %v1796 = vpop.f32.mrb[0].mxu0
        %1797 = vmatprep.mubr.bf16.mxu0 %v1606
        %1798 = vmatmul.mubr.bf16.gmra.mrb[0].mxu0 %v1605
        %v1799 = vpop.f32.mrb[0].mxu0
        %v1800 = vadd.f32 0.0, %v1799
        %v1801 = vpop.f32.mrb[0].mxu0
        %v1802 = vpop.f32.mrb[0].mxu0
        %v1803 = vadd.f32 0.0, %v1802
        %v1804 = vpop.f32.mrb[0].mxu0
        %1805 = vmatprep.mubr.bf16.mxu0 %v1610
        %1806 = vmatmul.mubr.bf16.gmra.mrb[0].mxu0 %v1609
        %v1807 = vpop.f32.mrb[0].mxu0
        %v1808 = vadd.f32 0.0, %v1807
        %v1809 = vpop.f32.mrb[0].mxu0
        %v1810 = vpop.f32.mrb[0].mxu0
        %v1811 = vadd.f32 0.0, %v1810
        %v1812 = vpop.f32.mrb[0].mxu0
        %1813 = vmatprep.mubr.bf16.mxu0 %v1614
        %1814 = vmatmul.mubr.bf16.gmra.mrb[0].mxu0 %v1613
        %v1815 = vpop.f32.mrb[0].mxu0
        %v1816 = vadd.f32 0.0, %v1815
        %v1817 = vpop.f32.mrb[0].mxu0
        %v1818 = vpop.f32.mrb[0].mxu0
        %v1819 = vadd.f32 0.0, %v1818
        %v1820 = vpop.f32.mrb[0].mxu0
        %1821 = vmatprep.mubr.bf16.mxu0 %v1618
        %1822 = vmatmul.mubr.bf16.gmra.mrb[0].mxu0 %v1617
        %v1823 = vpop.f32.mrb[0].mxu0
        %v1824 = vadd.f32 0.0, %v1823
        %v1825 = vpop.f32.mrb[0].mxu0
        %v1826 = vpop.f32.mrb[0].mxu0
        %v1827 = vadd.f32 0.0, %v1826
        %v1828 = vpop.f32.mrb[0].mxu0
        %1829 = vmatprep.mubr.bf16.mxu0 %v1622
        %1830 = vmatmul.mubr.bf16.gmra.mrb[0].mxu0 %v1621
        %v1831 = vpop.f32.mrb[0].mxu0
        %v1832 = vadd.f32 0.0, %v1831
        %v1833 = vpop.f32.mrb[0].mxu0
        %v1834 = vpop.f32.mrb[0].mxu0
        %v1835 = vadd.f32 0.0, %v1834
        %v1836 = vpop.f32.mrb[0].mxu0
        %1837 = vmatprep.mubr.bf16.mxu0 %v1626
        %1838 = vmatmul.mubr.bf16.gmra.mrb[0].mxu0 %v1625
        %v1839 = vpop.f32.mrb[0].mxu0
        %v1840 = vadd.f32 0.0, %v1839
        %v1841 = vpop.f32.mrb[0].mxu0
        %v1842 = vpop.f32.mrb[0].mxu0
        %v1843 = vadd.f32 0.0, %v1842
        %v1844 = vpop.f32.mrb[0].mxu0
        %1845 = vmatprep.mubr.bf16.mxu0 %v1630
        %1846 = vmatmul.mubr.bf16.gmra.mrb[0].mxu0 %v1629
        %v1847 = vpop.f32.mrb[0].mxu0
        %v1848 = vadd.f32 0.0, %v1847
        %v1849 = vpop.f32.mrb[0].mxu0
        %v1850 = vpop.f32.mrb[0].mxu0
        %v1851 = vadd.f32 0.0, %v1850
        %v1852 = vpop.f32.mrb[0].mxu0
        %1853 = vmatprep.mubr.bf16.mxu0 %v1634
        %1854 = vmatmul.mubr.bf16.gmra.mrb[0].mxu0 %v1633
        %v1855 = vpop.f32.mrb[0].mxu0
        %v1856 = vadd.f32 0.0, %v1855
        %v1857 = vpop.f32.mrb[0].mxu0
        %v1858 = vpop.f32.mrb[0].mxu0
        %v1859 = vadd.f32 0.0, %v1858
        %v1860 = vpop.f32.mrb[0].mxu0
        %1861 = vdwg.mxu0
        %1862 = vmatprep.subr.bf16.mxu0 0
        %1863 = vmatpush1.bf16.msra.mxu0 %v947
        %1864 = vmatprep.subr.bf16.mxu0 0
        %1865 = vmatpush1.bf16.msra.mxu0 %v948
        %1866 = vmatprep.subr.bf16.mxu0 0
        %1867 = vmatpush1.bf16.msra.mxu0 %v949
        %1868 = vmatprep.subr.bf16.mxu0 0
        %1869 = vmatpush1.bf16.msra.mxu0 %v950
        %1870 = vmatprep.subr.bf16.mxu0 0
        %1871 = vmatpush1.bf16.msra.mxu0 %v951
        %1872 = vmatprep.subr.bf16.mxu0 0
        %1873 = vmatpush1.bf16.msra.mxu0 %v952
        %1874 = vmatprep.subr.bf16.mxu0 0
        %1875 = vmatpush1.bf16.msra.mxu0 %v953
        %1876 = vmatprep.subr.bf16.mxu0 0
        %1877 = vmatpush1.bf16.msra.mxu0 %v954
        %1878 = vmatprep.subr.bf16.mxu0 0
        %1879 = vmatpush1.bf16.msra.mxu0 %v955
        %1880 = vmatprep.subr.bf16.mxu0 0
        %1881 = vmatpush1.bf16.msra.mxu0 %v956
        %1882 = vmatprep.subr.bf16.mxu0 0
        %1883 = vmatpush1.bf16.msra.mxu0 %v957
        %1884 = vmatprep.subr.bf16.mxu0 0
        %1885 = vmatpush1.bf16.msra.mxu0 %v958
        %1886 = vmatprep.subr.bf16.mxu0 0
        %1887 = vmatpush1.bf16.msra.mxu0 %v959
        %1888 = vmatprep.subr.bf16.mxu0 0
        %1889 = vmatpush1.bf16.msra.mxu0 %v960
        %1890 = vmatprep.subr.bf16.mxu0 0
        %1891 = vmatpush1.bf16.msra.mxu0 %v961
        %1892 = vmatprep.subr.bf16.mxu0 0
        %1893 = vmatpush1.bf16.msra.mxu0 %v962
        %1894 = vmatprep.mubr.bf16.mxu0 %v1576
        %1895 = vmatmul.mubr.bf16.gmra.mrb[0].mxu0 %v1575
        %v1896 = vpop.f32.mrb[0].mxu0
        %v1897 = vadd.f32 %v1736, %v1896
        %v1898 = vpop.f32.mrb[0].mxu0
        %v1899 = vpop.f32.mrb[0].mxu0
        %v1900 = vadd.f32 %v1739, %v1899
        %v1901 = vpop.f32.mrb[0].mxu0
        %1902 = vmatprep.mubr.bf16.mxu0 %v1580
        %1903 = vmatmul.mubr.bf16.gmra.mrb[0].mxu0 %v1579
        %v1904 = vpop.f32.mrb[0].mxu0
        %v1905 = vadd.f32 %v1744, %v1904
        %v1906 = vpop.f32.mrb[0].mxu0
        %v1907 = vpop.f32.mrb[0].mxu0
        %v1908 = vadd.f32 %v1747, %v1907
        %v1909 = vpop.f32.mrb[0].mxu0
        %1910 = vmatprep.mubr.bf16.mxu0 %v1584
        %1911 = vmatmul.mubr.bf16.gmra.mrb[0].mxu0 %v1583
        %v1912 = vpop.f32.mrb[0].mxu0
        %v1913 = vadd.f32 %v1752, %v1912
        %v1914 = vpop.f32.mrb[0].mxu0
        %v1915 = vpop.f32.mrb[0].mxu0
        %v1916 = vadd.f32 %v1755, %v1915
        %v1917 = vpop.f32.mrb[0].mxu0
        %1918 = vmatprep.mubr.bf16.mxu0 %v1588
        %1919 = vmatmul.mubr.bf16.gmra.mrb[0].mxu0 %v1587
        %v1920 = vpop.f32.mrb[0].mxu0
        %v1921 = vadd.f32 %v1760, %v1920
        %v1922 = vpop.f32.mrb[0].mxu0
        %v1923 = vpop.f32.mrb[0].mxu0
        %v1924 = vadd.f32 %v1763, %v1923
        %v1925 = vpop.f32.mrb[0].mxu0
        %1926 = vmatprep.mubr.bf16.mxu0 %v1592
        %1927 = vmatmul.mubr.bf16.gmra.mrb[0].mxu0 %v1591
        %v1928 = vpop.f32.mrb[0].mxu0
        %v1929 = vadd.f32 %v1768, %v1928
        %v1930 = vpop.f32.mrb[0].mxu0
        %v1931 = vpop.f32.mrb[0].mxu0
        %v1932 = vadd.f32 %v1771, %v1931
        %v1933 = vpop.f32.mrb[0].mxu0
        %1934 = vmatprep.mubr.bf16.mxu0 %v1596
        %1935 = vmatmul.mubr.bf16.gmra.mrb[0].mxu0 %v1595
        %v1936 = vpop.f32.mrb[0].mxu0
        %v1937 = vadd.f32 %v1776, %v1936
        %v1938 = vpop.f32.mrb[0].mxu0
        %v1939 = vpop.f32.mrb[0].mxu0
        %v1940 = vadd.f32 %v1779, %v1939
        %v1941 = vpop.f32.mrb[0].mxu0
        %1942 = vmatprep.mubr.bf16.mxu0 %v1600
        %1943 = vmatmul.mubr.bf16.gmra.mrb[0].mxu0 %v1599
        %v1944 = vpop.f32.mrb[0].mxu0
        %v1945 = vadd.f32 %v1784, %v1944
        %v1946 = vpop.f32.mrb[0].mxu0
        %v1947 = vpop.f32.mrb[0].mxu0
        %v1948 = vadd.f32 %v1787, %v1947
        %v1949 = vpop.f32.mrb[0].mxu0
        %1950 = vmatprep.mubr.bf16.mxu0 %v1604
        %1951 = vmatmul.mubr.bf16.gmra.mrb[0].mxu0 %v1603
        %v1952 = vpop.f32.mrb[0].mxu0
        %v1953 = vadd.f32 %v1792, %v1952
        %v1954 = vpop.f32.mrb[0].mxu0
        %v1955 = vpop.f32.mrb[0].mxu0
        %v1956 = vadd.f32 %v1795, %v1955
        %v1957 = vpop.f32.mrb[0].mxu0
        %1958 = vmatprep.mubr.bf16.mxu0 %v1608
        %1959 = vmatmul.mubr.bf16.gmra.mrb[0].mxu0 %v1607
        %v1960 = vpop.f32.mrb[0].mxu0
        %v1961 = vadd.f32 %v1800, %v1960
        %v1962 = vpop.f32.mrb[0].mxu0
        %v1963 = vpop.f32.mrb[0].mxu0
        %v1964 = vadd.f32 %v1803, %v1963
        %v1965 = vpop.f32.mrb[0].mxu0
        %1966 = vmatprep.mubr.bf16.mxu0 %v1612
        %1967 = vmatmul.mubr.bf16.gmra.mrb[0].mxu0 %v1611
        %v1968 = vpop.f32.mrb[0].mxu0
        %v1969 = vadd.f32 %v1808, %v1968
        %v1970 = vpop.f32.mrb[0].mxu0
        %v1971 = vpop.f32.mrb[0].mxu0
        %v1972 = vadd.f32 %v1811, %v1971
        %v1973 = vpop.f32.mrb[0].mxu0
        %1974 = vmatprep.mubr.bf16.mxu0 %v1616
        %1975 = vmatmul.mubr.bf16.gmra.mrb[0].mxu0 %v1615
        %v1976 = vpop.f32.mrb[0].mxu0
        %v1977 = vadd.f32 %v1816, %v1976
        %v1978 = vpop.f32.mrb[0].mxu0
        %v1979 = vpop.f32.mrb[0].mxu0
        %v1980 = vadd.f32 %v1819, %v1979
        %v1981 = vpop.f32.mrb[0].mxu0
        %1982 = vmatprep.mubr.bf16.mxu0 %v1620
        %1983 = vmatmul.mubr.bf16.gmra.mrb[0].mxu0 %v1619
        %v1984 = vpop.f32.mrb[0].mxu0
        %v1985 = vadd.f32 %v1824, %v1984
        %v1986 = vpop.f32.mrb[0].mxu0
        %v1987 = vpop.f32.mrb[0].mxu0
        %v1988 = vadd.f32 %v1827, %v1987
        %v1989 = vpop.f32.mrb[0].mxu0
        %1990 = vmatprep.mubr.bf16.mxu0 %v1624
        %1991 = vmatmul.mubr.bf16.gmra.mrb[0].mxu0 %v1623
        %v1992 = vpop.f32.mrb[0].mxu0
        %v1993 = vadd.f32 %v1832, %v1992
        %v1994 = vpop.f32.mrb[0].mxu0
        %v1995 = vpop.f32.mrb[0].mxu0
        %v1996 = vadd.f32 %v1835, %v1995
        %v1997 = vpop.f32.mrb[0].mxu0
        %1998 = vmatprep.mubr.bf16.mxu0 %v1628
        %1999 = vmatmul.mubr.bf16.gmra.mrb[0].mxu0 %v1627
        %v2000 = vpop.f32.mrb[0].mxu0
        %v2001 = vadd.f32 %v1840, %v2000
        %v2002 = vpop.f32.mrb[0].mxu0
        %v2003 = vpop.f32.mrb[0].mxu0
        %v2004 = vadd.f32 %v1843, %v2003
        %v2005 = vpop.f32.mrb[0].mxu0
        %2006 = vmatprep.mubr.bf16.mxu0 %v1632
        %2007 = vmatmul.mubr.bf16.gmra.mrb[0].mxu0 %v1631
        %v2008 = vpop.f32.mrb[0].mxu0
        %v2009 = vadd.f32 %v1848, %v2008
        %v2010 = vpop.f32.mrb[0].mxu0
        %v2011 = vpop.f32.mrb[0].mxu0
        %v2012 = vadd.f32 %v1851, %v2011
        %v2013 = vpop.f32.mrb[0].mxu0
        %2014 = vmatprep.mubr.bf16.mxu0 %v1636
        %2015 = vmatmul.mubr.bf16.gmra.mrb[0].mxu0 %v1635
        %v2016 = vpop.f32.mrb[0].mxu0
        %v2017 = vadd.f32 %v1856, %v2016
        %v2018 = vpop.f32.mrb[0].mxu0
        %v2019 = vpop.f32.mrb[0].mxu0
        %v2020 = vadd.f32 %v1859, %v2019
        %v2021 = vpop.f32.mrb[0].mxu0
        %2022 = vdwg.mxu0
        %v2023 = vld [vmem:[#allocation8] sm:$0xf]
        %v2024 = vld [vmem:[#allocation8 + $0x4] sm:$0xf]
        %v2025 = vld [vmem:[#allocation8 + $0x8] sm:$0xf]
        %v2026 = vld [vmem:[#allocation8 + $0xc] sm:$0xf]
        %v2027 = vld [vmem:[#allocation8 + $0x10] sm:$0xf]
        %v2028 = vld [vmem:[#allocation8 + $0x14] sm:$0xf]
        %v2029 = vld [vmem:[#allocation8 + $0x18] sm:$0xf]
        %v2030 = vld [vmem:[#allocation8 + $0x1c] sm:$0xf]
        %v2031 = vld [vmem:[#allocation8 + $0x20] sm:$0xf]
        %v2032 = vld [vmem:[#allocation8 + $0x24] sm:$0xf]
        %v2033 = vld [vmem:[#allocation8 + $0x28] sm:$0xf]
        %v2034 = vld [vmem:[#allocation8 + $0x2c] sm:$0xf]
        %v2035 = vld [vmem:[#allocation8 + $0x30] sm:$0xf]
        %v2036 = vld [vmem:[#allocation8 + $0x34] sm:$0xf]
        %v2037 = vld [vmem:[#allocation8 + $0x38] sm:$0xf]
        %v2038 = vld [vmem:[#allocation8 + $0x3c] sm:$0xf]
        %v2039 = vpack.c.bf16 %v1194, %v1191
        %v2040 = vpack.c.bf16 %v1202, %v1199
        %v2041 = vpack.c.bf16 %v1210, %v1207
        %v2042 = vpack.c.bf16 %v1218, %v1215
        %v2043 = vpack.c.bf16 %v1226, %v1223
        %v2044 = vpack.c.bf16 %v1234, %v1231
        %v2045 = vpack.c.bf16 %v1242, %v1239
        %v2046 = vpack.c.bf16 %v1250, %v1247
        %v2047 = vpack.c.bf16 %v1258, %v1255
        %v2048 = vpack.c.bf16 %v1266, %v1263
        %v2049 = vpack.c.bf16 %v1274, %v1271
        %v2050 = vpack.c.bf16 %v1282, %v1279
        %v2051 = vpack.c.bf16 %v1290, %v1287
        %v2052 = vpack.c.bf16 %v1298, %v1295
        %v2053 = vpack.c.bf16 %v1306, %v1303
        %v2054 = vpack.c.bf16 %v1314, %v1311
        %v2055 = vld [vmem:[#allocation8 + $0x40] sm:$0xf]
        %v2056 = vld [vmem:[#allocation8 + $0x44] sm:$0xf]
        %v2057 = vld [vmem:[#allocation8 + $0x48] sm:$0xf]
        %v2058 = vld [vmem:[#allocation8 + $0x4c] sm:$0xf]
        %v2059 = vld [vmem:[#allocation8 + $0x50] sm:$0xf]
        %v2060 = vld [vmem:[#allocation8 + $0x54] sm:$0xf]
        %v2061 = vld [vmem:[#allocation8 + $0x58] sm:$0xf]
        %v2062 = vld [vmem:[#allocation8 + $0x5c] sm:$0xf]
        %v2063 = vld [vmem:[#allocation8 + $0x60] sm:$0xf]
        %v2064 = vld [vmem:[#allocation8 + $0x64] sm:$0xf]
        %v2065 = vld [vmem:[#allocation8 + $0x68] sm:$0xf]
        %v2066 = vld [vmem:[#allocation8 + $0x6c] sm:$0xf]
        %v2067 = vld [vmem:[#allocation8 + $0x70] sm:$0xf]
        %v2068 = vld [vmem:[#allocation8 + $0x74] sm:$0xf]
        %v2069 = vld [vmem:[#allocation8 + $0x78] sm:$0xf]
        %v2070 = vld [vmem:[#allocation8 + $0x7c] sm:$0xf]
        %v2087 = vunpack.c.l.b16 %v2055
        %v2088 = vunpack.c.l.b16 %v2056
        %v2089 = vunpack.c.l.b16 %v2057
        %v2090 = vunpack.c.l.b16 %v2058
        %v2091 = vunpack.c.l.b16 %v2059
        %v2092 = vunpack.c.l.b16 %v2060
        %v2093 = vunpack.c.l.b16 %v2061
        %v2094 = vunpack.c.l.b16 %v2062
        %v2095 = vunpack.c.l.b16 %v2063
        %v2096 = vunpack.c.l.b16 %v2064
        %v2097 = vunpack.c.l.b16 %v2065
        %v2098 = vunpack.c.l.b16 %v2066
        %v2099 = vunpack.c.l.b16 %v2067
        %v2100 = vunpack.c.l.b16 %v2068
        %v2101 = vunpack.c.l.b16 %v2069
        %v2102 = vunpack.c.l.b16 %v2070
        %v2103 = vpack.c.b16 %v2088, %v2087
        %v2104 = vpack.c.b16 %v2090, %v2089
        %v2105 = vpack.c.b16 %v2092, %v2091
        %v2106 = vpack.c.b16 %v2094, %v2093
        %v2107 = vpack.c.b16 %v2096, %v2095
        %v2108 = vpack.c.b16 %v2098, %v2097
        %v2109 = vpack.c.b16 %v2100, %v2099
        %v2110 = vpack.c.b16 %v2102, %v2101
        %2119 = vmatprep.subr.bf16.mxu0 0
        %2120 = vmatpush1.bf16.msra.mxu0 %v2103
        %2121 = vmatprep.subr.bf16.mxu0 0
        %2122 = vmatpush1.bf16.msra.mxu0 %v2104
        %2123 = vmatprep.subr.bf16.mxu0 0
        %2124 = vmatpush1.bf16.msra.mxu0 %v2105
        %2125 = vmatprep.subr.bf16.mxu0 0
        %2126 = vmatpush1.bf16.msra.mxu0 %v2106
        %2127 = vmatprep.subr.bf16.mxu0 0
        %2128 = vmatpush1.bf16.msra.mxu0 %v2107
        %2129 = vmatprep.subr.bf16.mxu0 0
        %2130 = vmatpush1.bf16.msra.mxu0 %v2108
        %2131 = vmatprep.subr.bf16.mxu0 0
        %2132 = vmatpush1.bf16.msra.mxu0 %v2109
        %2133 = vmatprep.subr.bf16.mxu0 0
        %2134 = vmatpush1.bf16.msra.mxu0 %v2110
        %2135 = vmatprep.subr.bf16.mxu0 0
        %2136 = vmatpush1.bf16.msra.mxu0 0
        %2137 = vmatprep.subr.bf16.mxu0 0
        %2138 = vmatpush1.bf16.msra.mxu0 0
        %2139 = vmatprep.subr.bf16.mxu0 0
        %2140 = vmatpush1.bf16.msra.mxu0 0
        %2141 = vmatprep.subr.bf16.mxu0 0
        %2142 = vmatpush1.bf16.msra.mxu0 0
        %2143 = vmatprep.subr.bf16.mxu0 0
        %2144 = vmatpush1.bf16.msra.mxu0 0
        %2145 = vmatprep.subr.bf16.mxu0 0
        %2146 = vmatpush1.bf16.msra.mxu0 0
        %2147 = vmatprep.subr.bf16.mxu0 0
        %2148 = vmatpush1.bf16.msra.mxu0 0
        %2149 = vmatprep.subr.bf16.mxu0 0
        %2150 = vmatpush1.bf16.msra.mxu0 0
        %2151 = vmatprep.mubr.bf16.mxu0 0
        %2152 = vmatmul.mubr.bf16.gmra.mrb[0].mxu0 %v2039
        %v2153 = vpop.f32.mrb[0].mxu0
        %v2154 = vadd.f32 0.0, %v2153
        %v2155 = vpop.f32.mrb[0].mxu0
        %v2156 = vpop.f32.mrb[0].mxu0
        %v2157 = vadd.f32 0.0, %v2156
        %v2158 = vpop.f32.mrb[0].mxu0
        %2159 = vmatprep.mubr.bf16.mxu0 0
        %2160 = vmatmul.mubr.bf16.gmra.mrb[0].mxu0 %v2040
        %v2161 = vpop.f32.mrb[0].mxu0
        %v2162 = vadd.f32 0.0, %v2161
        %v2163 = vpop.f32.mrb[0].mxu0
        %v2164 = vpop.f32.mrb[0].mxu0
        %v2165 = vadd.f32 0.0, %v2164
        %v2166 = vpop.f32.mrb[0].mxu0
        %2167 = vmatprep.mubr.bf16.mxu0 0
        %2168 = vmatmul.mubr.bf16.gmra.mrb[0].mxu0 %v2041
        %v2169 = vpop.f32.mrb[0].mxu0
        %v2170 = vadd.f32 0.0, %v2169
        %v2171 = vpop.f32.mrb[0].mxu0
        %v2172 = vpop.f32.mrb[0].mxu0
        %v2173 = vadd.f32 0.0, %v2172
        %v2174 = vpop.f32.mrb[0].mxu0
        %2175 = vmatprep.mubr.bf16.mxu0 0
        %2176 = vmatmul.mubr.bf16.gmra.mrb[0].mxu0 %v2042
        %v2177 = vpop.f32.mrb[0].mxu0
        %v2178 = vadd.f32 0.0, %v2177
        %v2179 = vpop.f32.mrb[0].mxu0
        %v2180 = vpop.f32.mrb[0].mxu0
        %v2181 = vadd.f32 0.0, %v2180
        %v2182 = vpop.f32.mrb[0].mxu0
        %2183 = vmatprep.mubr.bf16.mxu0 0
        %2184 = vmatmul.mubr.bf16.gmra.mrb[0].mxu0 %v2043
        %v2185 = vpop.f32.mrb[0].mxu0
        %v2186 = vadd.f32 0.0, %v2185
        %v2187 = vpop.f32.mrb[0].mxu0
        %v2188 = vpop.f32.mrb[0].mxu0
        %v2189 = vadd.f32 0.0, %v2188
        %v2190 = vpop.f32.mrb[0].mxu0
        %2191 = vmatprep.mubr.bf16.mxu0 0
        %2192 = vmatmul.mubr.bf16.gmra.mrb[0].mxu0 %v2044
        %v2193 = vpop.f32.mrb[0].mxu0
        %v2194 = vadd.f32 0.0, %v2193
        %v2195 = vpop.f32.mrb[0].mxu0
        %v2196 = vpop.f32.mrb[0].mxu0
        %v2197 = vadd.f32 0.0, %v2196
        %v2198 = vpop.f32.mrb[0].mxu0
        %2199 = vmatprep.mubr.bf16.mxu0 0
        %2200 = vmatmul.mubr.bf16.gmra.mrb[0].mxu0 %v2045
        %v2201 = vpop.f32.mrb[0].mxu0
        %v2202 = vadd.f32 0.0, %v2201
        %v2203 = vpop.f32.mrb[0].mxu0
        %v2204 = vpop.f32.mrb[0].mxu0
        %v2205 = vadd.f32 0.0, %v2204
        %v2206 = vpop.f32.mrb[0].mxu0
        %2207 = vmatprep.mubr.bf16.mxu0 0
        %2208 = vmatmul.mubr.bf16.gmra.mrb[0].mxu0 %v2046
        %v2209 = vpop.f32.mrb[0].mxu0
        %v2210 = vadd.f32 0.0, %v2209
        %v2211 = vpop.f32.mrb[0].mxu0
        %v2212 = vpop.f32.mrb[0].mxu0
        %v2213 = vadd.f32 0.0, %v2212
        %v2214 = vpop.f32.mrb[0].mxu0
        %2215 = vmatprep.mubr.bf16.mxu0 0
        %2216 = vmatmul.mubr.bf16.gmra.mrb[0].mxu0 %v2047
        %v2217 = vpop.f32.mrb[0].mxu0
        %v2218 = vadd.f32 0.0, %v2217
        %v2219 = vpop.f32.mrb[0].mxu0
        %v2220 = vpop.f32.mrb[0].mxu0
        %v2221 = vadd.f32 0.0, %v2220
        %v2222 = vpop.f32.mrb[0].mxu0
        %2223 = vmatprep.mubr.bf16.mxu0 0
        %2224 = vmatmul.mubr.bf16.gmra.mrb[0].mxu0 %v2048
        %v2225 = vpop.f32.mrb[0].mxu0
        %v2226 = vadd.f32 0.0, %v2225
        %v2227 = vpop.f32.mrb[0].mxu0
        %v2228 = vpop.f32.mrb[0].mxu0
        %v2229 = vadd.f32 0.0, %v2228
        %v2230 = vpop.f32.mrb[0].mxu0
        %2231 = vmatprep.mubr.bf16.mxu0 0
        %2232 = vmatmul.mubr.bf16.gmra.mrb[0].mxu0 %v2049
        %v2233 = vpop.f32.mrb[0].mxu0
        %v2234 = vadd.f32 0.0, %v2233
        %v2235 = vpop.f32.mrb[0].mxu0
        %v2236 = vpop.f32.mrb[0].mxu0
        %v2237 = vadd.f32 0.0, %v2236
        %v2238 = vpop.f32.mrb[0].mxu0
        %2239 = vmatprep.mubr.bf16.mxu0 0
        %2240 = vmatmul.mubr.bf16.gmra.mrb[0].mxu0 %v2050
        %v2241 = vpop.f32.mrb[0].mxu0
        %v2242 = vadd.f32 0.0, %v2241
        %v2243 = vpop.f32.mrb[0].mxu0
        %v2244 = vpop.f32.mrb[0].mxu0
        %v2245 = vadd.f32 0.0, %v2244
        %v2246 = vpop.f32.mrb[0].mxu0
        %2247 = vmatprep.mubr.bf16.mxu0 0
        %2248 = vmatmul.mubr.bf16.gmra.mrb[0].mxu0 %v2051
        %v2249 = vpop.f32.mrb[0].mxu0
        %v2250 = vadd.f32 0.0, %v2249
        %v2251 = vpop.f32.mrb[0].mxu0
        %v2252 = vpop.f32.mrb[0].mxu0
        %v2253 = vadd.f32 0.0, %v2252
        %v2254 = vpop.f32.mrb[0].mxu0
        %2255 = vmatprep.mubr.bf16.mxu0 0
        %2256 = vmatmul.mubr.bf16.gmra.mrb[0].mxu0 %v2052
        %v2257 = vpop.f32.mrb[0].mxu0
        %v2258 = vadd.f32 0.0, %v2257
        %v2259 = vpop.f32.mrb[0].mxu0
        %v2260 = vpop.f32.mrb[0].mxu0
        %v2261 = vadd.f32 0.0, %v2260
        %v2262 = vpop.f32.mrb[0].mxu0
        %2263 = vmatprep.mubr.bf16.mxu0 0
        %2264 = vmatmul.mubr.bf16.gmra.mrb[0].mxu0 %v2053
        %v2265 = vpop.f32.mrb[0].mxu0
        %v2266 = vadd.f32 0.0, %v2265
        %v2267 = vpop.f32.mrb[0].mxu0
        %v2268 = vpop.f32.mrb[0].mxu0
        %v2269 = vadd.f32 0.0, %v2268
        %v2270 = vpop.f32.mrb[0].mxu0
        %2271 = vmatprep.mubr.bf16.mxu0 0
        %2272 = vmatmul.mubr.bf16.gmra.mrb[0].mxu0 %v2054
        %v2273 = vpop.f32.mrb[0].mxu0
        %v2274 = vadd.f32 0.0, %v2273
        %v2275 = vpop.f32.mrb[0].mxu0
        %v2276 = vpop.f32.mrb[0].mxu0
        %v2277 = vadd.f32 0.0, %v2276
        %v2278 = vpop.f32.mrb[0].mxu0
        %2279 = vdwg.mxu0
        %v2312 = vunpack.c.l.b16 %v323
        %v2313 = vunpack.c.l.b16 %v324
        %v2314 = vunpack.c.l.b16 %v325
        %v2315 = vunpack.c.l.b16 %v326
        %v2316 = vunpack.c.l.b16 %v327
        %v2317 = vunpack.c.l.b16 %v328
        %v2318 = vunpack.c.l.b16 %v329
        %v2319 = vunpack.c.l.b16 %v330
        %v2320 = vunpack.c.l.b16 %v331
        %v2321 = vunpack.c.l.b16 %v332
        %v2322 = vunpack.c.l.b16 %v333
        %v2323 = vunpack.c.l.b16 %v334
        %v2324 = vunpack.c.l.b16 %v335
        %v2325 = vunpack.c.l.b16 %v336
        %v2326 = vunpack.c.l.b16 %v337
        %v2327 = vunpack.c.l.b16 %v338
        %v2328 = vunpack.c.l.b16 %v339
        %v2329 = vunpack.c.l.b16 %v340
        %v2330 = vunpack.c.l.b16 %v341
        %v2331 = vunpack.c.l.b16 %v342
        %v2332 = vunpack.c.l.b16 %v343
        %v2333 = vunpack.c.l.b16 %v344
        %v2334 = vunpack.c.l.b16 %v345
        %v2335 = vunpack.c.l.b16 %v346
        %v2336 = vunpack.c.l.b16 %v347
        %v2337 = vunpack.c.l.b16 %v348
        %v2338 = vunpack.c.l.b16 %v349
        %v2339 = vunpack.c.l.b16 %v350
        %v2340 = vunpack.c.l.b16 %v351
        %v2341 = vunpack.c.l.b16 %v352
        %v2342 = vunpack.c.l.b16 %v353
        %v2343 = vunpack.c.l.b16 %v354
        %v2344 = vpack.c.b16 %v2313, %v2312
        %v2345 = vpack.c.b16 %v2315, %v2314
        %v2346 = vpack.c.b16 %v2317, %v2316
        %v2347 = vpack.c.b16 %v2319, %v2318
        %v2348 = vpack.c.b16 %v2321, %v2320
        %v2349 = vpack.c.b16 %v2323, %v2322
        %v2350 = vpack.c.b16 %v2325, %v2324
        %v2351 = vpack.c.b16 %v2327, %v2326
        %v2352 = vpack.c.b16 %v2329, %v2328
        %v2353 = vpack.c.b16 %v2331, %v2330
        %v2354 = vpack.c.b16 %v2333, %v2332
        %v2355 = vpack.c.b16 %v2335, %v2334
        %v2356 = vpack.c.b16 %v2337, %v2336
        %v2357 = vpack.c.b16 %v2339, %v2338
        %v2358 = vpack.c.b16 %v2341, %v2340
        %v2359 = vpack.c.b16 %v2343, %v2342
        %v2392 = vunpack.c.l.b16 %v2023
        %v2393 = vunpack.c.l.b16 %v2024
        %v2394 = vunpack.c.l.b16 %v2025
        %v2395 = vunpack.c.l.b16 %v2026
        %v2396 = vunpack.c.l.b16 %v2027
        %v2397 = vunpack.c.l.b16 %v2028
        %v2398 = vunpack.c.l.b16 %v2029
        %v2399 = vunpack.c.l.b16 %v2030
        %v2400 = vunpack.c.l.b16 %v2031
        %v2401 = vunpack.c.l.b16 %v2032
        %v2402 = vunpack.c.l.b16 %v2033
        %v2403 = vunpack.c.l.b16 %v2034
        %v2404 = vunpack.c.l.b16 %v2035
        %v2405 = vunpack.c.l.b16 %v2036
        %v2406 = vunpack.c.l.b16 %v2037
        %v2407 = vunpack.c.l.b16 %v2038
        %v2408 = vpack.c.b16 %v2393, %v2392
        %v2409 = vpack.c.b16 %v2395, %v2394
        %v2410 = vpack.c.b16 %v2397, %v2396
        %v2411 = vpack.c.b16 %v2399, %v2398
        %v2412 = vpack.c.b16 %v2401, %v2400
        %v2413 = vpack.c.b16 %v2403, %v2402
        %v2414 = vpack.c.b16 %v2405, %v2404
        %v2415 = vpack.c.b16 %v2407, %v2406
        %2424 = vmatprep.subr.bf16.mxu0 0
        %2425 = vmatpush1.bf16.msra.mxu0 %v2408
        %2426 = vmatprep.subr.bf16.mxu0 0
        %2427 = vmatpush1.bf16.msra.mxu0 %v2409
        %2428 = vmatprep.subr.bf16.mxu0 0
        %2429 = vmatpush1.bf16.msra.mxu0 %v2410
        %2430 = vmatprep.subr.bf16.mxu0 0
        %2431 = vmatpush1.bf16.msra.mxu0 %v2411
        %2432 = vmatprep.subr.bf16.mxu0 0
        %2433 = vmatpush1.bf16.msra.mxu0 %v2412
        %2434 = vmatprep.subr.bf16.mxu0 0
        %2435 = vmatpush1.bf16.msra.mxu0 %v2413
        %2436 = vmatprep.subr.bf16.mxu0 0
        %2437 = vmatpush1.bf16.msra.mxu0 %v2414
        %2438 = vmatprep.subr.bf16.mxu0 0
        %2439 = vmatpush1.bf16.msra.mxu0 %v2415
        %2440 = vmatprep.subr.bf16.mxu0 0
        %2441 = vmatpush1.bf16.msra.mxu0 0
        %2442 = vmatprep.subr.bf16.mxu0 0
        %2443 = vmatpush1.bf16.msra.mxu0 0
        %2444 = vmatprep.subr.bf16.mxu0 0
        %2445 = vmatpush1.bf16.msra.mxu0 0
        %2446 = vmatprep.subr.bf16.mxu0 0
        %2447 = vmatpush1.bf16.msra.mxu0 0
        %2448 = vmatprep.subr.bf16.mxu0 0
        %2449 = vmatpush1.bf16.msra.mxu0 0
        %2450 = vmatprep.subr.bf16.mxu0 0
        %2451 = vmatpush1.bf16.msra.mxu0 0
        %2452 = vmatprep.subr.bf16.mxu0 0
        %2453 = vmatpush1.bf16.msra.mxu0 0
        %2454 = vmatprep.subr.bf16.mxu0 0
        %2455 = vmatpush1.bf16.msra.mxu0 0
        %2456 = vmatprep.mubr.bf16.mxu0 0
        %2457 = vmatmul.mubr.bf16.gmra.mrb[0].mxu0 %v2344
        %v2458 = vpop.f32.mrb[0].mxu0
        %v2459 = vadd.f32 %v2154, %v2458
        %v2460 = vpop.f32.mrb[0].mxu0
        %v2461 = vpop.f32.mrb[0].mxu0
        %v2462 = vadd.f32 %v2157, %v2461
        %v2463 = vpop.f32.mrb[0].mxu0
        %2464 = vmatprep.mubr.bf16.mxu0 0
        %2465 = vmatmul.mubr.bf16.gmra.mrb[0].mxu0 %v2345
        %v2466 = vpop.f32.mrb[0].mxu0
        %v2467 = vadd.f32 %v2162, %v2466
        %v2468 = vpop.f32.mrb[0].mxu0
        %v2469 = vpop.f32.mrb[0].mxu0
        %v2470 = vadd.f32 %v2165, %v2469
        %v2471 = vpop.f32.mrb[0].mxu0
        %2472 = vmatprep.mubr.bf16.mxu0 0
        %2473 = vmatmul.mubr.bf16.gmra.mrb[0].mxu0 %v2346
        %v2474 = vpop.f32.mrb[0].mxu0
        %v2475 = vadd.f32 %v2170, %v2474
        %v2476 = vpop.f32.mrb[0].mxu0
        %v2477 = vpop.f32.mrb[0].mxu0
        %v2478 = vadd.f32 %v2173, %v2477
        %v2479 = vpop.f32.mrb[0].mxu0
        %2480 = vmatprep.mubr.bf16.mxu0 0
        %2481 = vmatmul.mubr.bf16.gmra.mrb[0].mxu0 %v2347
        %v2482 = vpop.f32.mrb[0].mxu0
        %v2483 = vadd.f32 %v2178, %v2482
        %v2484 = vpop.f32.mrb[0].mxu0
        %v2485 = vpop.f32.mrb[0].mxu0
        %v2486 = vadd.f32 %v2181, %v2485
        %v2487 = vpop.f32.mrb[0].mxu0
        %2488 = vmatprep.mubr.bf16.mxu0 0
        %2489 = vmatmul.mubr.bf16.gmra.mrb[0].mxu0 %v2348
        %v2490 = vpop.f32.mrb[0].mxu0
        %v2491 = vadd.f32 %v2186, %v2490
        %v2492 = vpop.f32.mrb[0].mxu0
        %v2493 = vpop.f32.mrb[0].mxu0
        %v2494 = vadd.f32 %v2189, %v2493
        %v2495 = vpop.f32.mrb[0].mxu0
        %2496 = vmatprep.mubr.bf16.mxu0 0
        %2497 = vmatmul.mubr.bf16.gmra.mrb[0].mxu0 %v2349
        %v2498 = vpop.f32.mrb[0].mxu0
        %v2499 = vadd.f32 %v2194, %v2498
        %v2500 = vpop.f32.mrb[0].mxu0
        %v2501 = vpop.f32.mrb[0].mxu0
        %v2502 = vadd.f32 %v2197, %v2501
        %v2503 = vpop.f32.mrb[0].mxu0
        %2504 = vmatprep.mubr.bf16.mxu0 0
        %2505 = vmatmul.mubr.bf16.gmra.mrb[0].mxu0 %v2350
        %v2506 = vpop.f32.mrb[0].mxu0
        %v2507 = vadd.f32 %v2202, %v2506
        %v2508 = vpop.f32.mrb[0].mxu0
        %v2509 = vpop.f32.mrb[0].mxu0
        %v2510 = vadd.f32 %v2205, %v2509
        %v2511 = vpop.f32.mrb[0].mxu0
        %2512 = vmatprep.mubr.bf16.mxu0 0
        %2513 = vmatmul.mubr.bf16.gmra.mrb[0].mxu0 %v2351
        %v2514 = vpop.f32.mrb[0].mxu0
        %v2515 = vadd.f32 %v2210, %v2514
        %v2516 = vpop.f32.mrb[0].mxu0
        %v2517 = vpop.f32.mrb[0].mxu0
        %v2518 = vadd.f32 %v2213, %v2517
        %v2519 = vpop.f32.mrb[0].mxu0
        %2520 = vmatprep.mubr.bf16.mxu0 0
        %2521 = vmatmul.mubr.bf16.gmra.mrb[0].mxu0 %v2352
        %v2522 = vpop.f32.mrb[0].mxu0
        %v2523 = vadd.f32 %v2218, %v2522
        %v2524 = vpop.f32.mrb[0].mxu0
        %v2525 = vpop.f32.mrb[0].mxu0
        %v2526 = vadd.f32 %v2221, %v2525
        %v2527 = vpop.f32.mrb[0].mxu0
        %2528 = vmatprep.mubr.bf16.mxu0 0
        %2529 = vmatmul.mubr.bf16.gmra.mrb[0].mxu0 %v2353
        %v2530 = vpop.f32.mrb[0].mxu0
        %v2531 = vadd.f32 %v2226, %v2530
        %v2532 = vpop.f32.mrb[0].mxu0
        %v2533 = vpop.f32.mrb[0].mxu0
        %v2534 = vadd.f32 %v2229, %v2533
        %v2535 = vpop.f32.mrb[0].mxu0
        %2536 = vmatprep.mubr.bf16.mxu0 0
        %2537 = vmatmul.mubr.bf16.gmra.mrb[0].mxu0 %v2354
        %v2538 = vpop.f32.mrb[0].mxu0
        %v2539 = vadd.f32 %v2234, %v2538
        %v2540 = vpop.f32.mrb[0].mxu0
        %v2541 = vpop.f32.mrb[0].mxu0
        %v2542 = vadd.f32 %v2237, %v2541
        %v2543 = vpop.f32.mrb[0].mxu0
        %2544 = vmatprep.mubr.bf16.mxu0 0
        %2545 = vmatmul.mubr.bf16.gmra.mrb[0].mxu0 %v2355
        %v2546 = vpop.f32.mrb[0].mxu0
        %v2547 = vadd.f32 %v2242, %v2546
        %v2548 = vpop.f32.mrb[0].mxu0
        %v2549 = vpop.f32.mrb[0].mxu0
        %v2550 = vadd.f32 %v2245, %v2549
        %v2551 = vpop.f32.mrb[0].mxu0
        %2552 = vmatprep.mubr.bf16.mxu0 0
        %2553 = vmatmul.mubr.bf16.gmra.mrb[0].mxu0 %v2356
        %v2554 = vpop.f32.mrb[0].mxu0
        %v2555 = vadd.f32 %v2250, %v2554
        %v2556 = vpop.f32.mrb[0].mxu0
        %v2557 = vpop.f32.mrb[0].mxu0
        %v2558 = vadd.f32 %v2253, %v2557
        %v2559 = vpop.f32.mrb[0].mxu0
        %2560 = vmatprep.mubr.bf16.mxu0 0
        %2561 = vmatmul.mubr.bf16.gmra.mrb[0].mxu0 %v2357
        %v2562 = vpop.f32.mrb[0].mxu0
        %v2563 = vadd.f32 %v2258, %v2562
        %v2564 = vpop.f32.mrb[0].mxu0
        %v2565 = vpop.f32.mrb[0].mxu0
        %v2566 = vadd.f32 %v2261, %v2565
        %v2567 = vpop.f32.mrb[0].mxu0
        %2568 = vmatprep.mubr.bf16.mxu0 0
        %2569 = vmatmul.mubr.bf16.gmra.mrb[0].mxu0 %v2358
        %v2570 = vpop.f32.mrb[0].mxu0
        %v2571 = vadd.f32 %v2266, %v2570
        %v2572 = vpop.f32.mrb[0].mxu0
        %v2573 = vpop.f32.mrb[0].mxu0
        %v2574 = vadd.f32 %v2269, %v2573
        %v2575 = vpop.f32.mrb[0].mxu0
        %2576 = vmatprep.mubr.bf16.mxu0 0
        %2577 = vmatmul.mubr.bf16.gmra.mrb[0].mxu0 %v2359
        %v2578 = vpop.f32.mrb[0].mxu0
        %v2579 = vadd.f32 %v2274, %v2578
        %v2580 = vpop.f32.mrb[0].mxu0
        %v2581 = vpop.f32.mrb[0].mxu0
        %v2582 = vadd.f32 %v2277, %v2581
        %v2583 = vpop.f32.mrb[0].mxu0
        %2584 = vdwg.mxu0
        %v2585 = vpack.c.bf16 %v1900, %v1897
        %v2586 = vpack.c.bf16 %v1908, %v1905
        %v2587 = vpack.c.bf16 %v1916, %v1913
        %v2588 = vpack.c.bf16 %v1924, %v1921
        %v2589 = vpack.c.bf16 %v1932, %v1929
        %v2590 = vpack.c.bf16 %v1940, %v1937
        %v2591 = vpack.c.bf16 %v1948, %v1945
        %v2592 = vpack.c.bf16 %v1956, %v1953
        %v2593 = vpack.c.bf16 %v1964, %v1961
        %v2594 = vpack.c.bf16 %v1972, %v1969
        %v2595 = vpack.c.bf16 %v1980, %v1977
        %v2596 = vpack.c.bf16 %v1988, %v1985
        %v2597 = vpack.c.bf16 %v1996, %v1993
        %v2598 = vpack.c.bf16 %v2004, %v2001
        %v2599 = vpack.c.bf16 %v2012, %v2009
        %v2600 = vpack.c.bf16 %v2020, %v2017
        %v2601 = vld [vmem:[#allocation8 + $0x80] sm:$0xf]
        %v2602 = vld [vmem:[#allocation8 + $0x84] sm:$0xf]
        %v2603 = vld [vmem:[#allocation8 + $0x88] sm:$0xf]
        %v2604 = vld [vmem:[#allocation8 + $0x8c] sm:$0xf]
        %v2605 = vld [vmem:[#allocation8 + $0x90] sm:$0xf]
        %v2606 = vld [vmem:[#allocation8 + $0x94] sm:$0xf]
        %v2607 = vld [vmem:[#allocation8 + $0x98] sm:$0xf]
        %v2608 = vld [vmem:[#allocation8 + $0x9c] sm:$0xf]
        %v2609 = vld [vmem:[#allocation8 + $0xa0] sm:$0xf]
        %v2610 = vld [vmem:[#allocation8 + $0xa4] sm:$0xf]
        %v2611 = vld [vmem:[#allocation8 + $0xa8] sm:$0xf]
        %v2612 = vld [vmem:[#allocation8 + $0xac] sm:$0xf]
        %v2613 = vld [vmem:[#allocation8 + $0xb0] sm:$0xf]
        %v2614 = vld [vmem:[#allocation8 + $0xb4] sm:$0xf]
        %v2615 = vld [vmem:[#allocation8 + $0xb8] sm:$0xf]
        %v2616 = vld [vmem:[#allocation8 + $0xbc] sm:$0xf]
        %v2633 = vunpack.c.l.b16 %v2601
        %v2634 = vunpack.c.l.b16 %v2602
        %v2635 = vunpack.c.l.b16 %v2603
        %v2636 = vunpack.c.l.b16 %v2604
        %v2637 = vunpack.c.l.b16 %v2605
        %v2638 = vunpack.c.l.b16 %v2606
        %v2639 = vunpack.c.l.b16 %v2607
        %v2640 = vunpack.c.l.b16 %v2608
        %v2641 = vunpack.c.l.b16 %v2609
        %v2642 = vunpack.c.l.b16 %v2610
        %v2643 = vunpack.c.l.b16 %v2611
        %v2644 = vunpack.c.l.b16 %v2612
        %v2645 = vunpack.c.l.b16 %v2613
        %v2646 = vunpack.c.l.b16 %v2614
        %v2647 = vunpack.c.l.b16 %v2615
        %v2648 = vunpack.c.l.b16 %v2616
        %v2649 = vpack.c.b16 %v2634, %v2633
        %v2650 = vpack.c.b16 %v2636, %v2635
        %v2651 = vpack.c.b16 %v2638, %v2637
        %v2652 = vpack.c.b16 %v2640, %v2639
        %v2653 = vpack.c.b16 %v2642, %v2641
        %v2654 = vpack.c.b16 %v2644, %v2643
        %v2655 = vpack.c.b16 %v2646, %v2645
        %v2656 = vpack.c.b16 %v2648, %v2647
        %2665 = vmatprep.subr.bf16.mxu0 0
        %2666 = vmatpush1.bf16.msra.mxu0 %v2649
        %2667 = vmatprep.subr.bf16.mxu0 0
        %2668 = vmatpush1.bf16.msra.mxu0 %v2650
        %2669 = vmatprep.subr.bf16.mxu0 0
        %2670 = vmatpush1.bf16.msra.mxu0 %v2651
        %2671 = vmatprep.subr.bf16.mxu0 0
        %2672 = vmatpush1.bf16.msra.mxu0 %v2652
        %2673 = vmatprep.subr.bf16.mxu0 0
        %2674 = vmatpush1.bf16.msra.mxu0 %v2653
        %2675 = vmatprep.subr.bf16.mxu0 0
        %2676 = vmatpush1.bf16.msra.mxu0 %v2654
        %2677 = vmatprep.subr.bf16.mxu0 0
        %2678 = vmatpush1.bf16.msra.mxu0 %v2655
        %2679 = vmatprep.subr.bf16.mxu0 0
        %2680 = vmatpush1.bf16.msra.mxu0 %v2656
        %2681 = vmatprep.subr.bf16.mxu0 0
        %2682 = vmatpush1.bf16.msra.mxu0 0
        %2683 = vmatprep.subr.bf16.mxu0 0
        %2684 = vmatpush1.bf16.msra.mxu0 0
        %2685 = vmatprep.subr.bf16.mxu0 0
        %2686 = vmatpush1.bf16.msra.mxu0 0
        %2687 = vmatprep.subr.bf16.mxu0 0
        %2688 = vmatpush1.bf16.msra.mxu0 0
        %2689 = vmatprep.subr.bf16.mxu0 0
        %2690 = vmatpush1.bf16.msra.mxu0 0
        %2691 = vmatprep.subr.bf16.mxu0 0
        %2692 = vmatpush1.bf16.msra.mxu0 0
        %2693 = vmatprep.subr.bf16.mxu0 0
        %2694 = vmatpush1.bf16.msra.mxu0 0
        %2695 = vmatprep.subr.bf16.mxu0 0
        %2696 = vmatpush1.bf16.msra.mxu0 0
        %2697 = vmatprep.mubr.bf16.mxu0 0
        %2698 = vmatmul.mubr.bf16.gmra.mrb[0].mxu0 %v2585
        %v2699 = vpop.f32.mrb[0].mxu0
        %v2700 = vadd.f32 0.0, %v2699
        %v2701 = vpop.f32.mrb[0].mxu0
        %v2702 = vpop.f32.mrb[0].mxu0
        %v2703 = vadd.f32 0.0, %v2702
        %v2704 = vpop.f32.mrb[0].mxu0
        %2705 = vmatprep.mubr.bf16.mxu0 0
        %2706 = vmatmul.mubr.bf16.gmra.mrb[0].mxu0 %v2586
        %v2707 = vpop.f32.mrb[0].mxu0
        %v2708 = vadd.f32 0.0, %v2707
        %v2709 = vpop.f32.mrb[0].mxu0
        %v2710 = vpop.f32.mrb[0].mxu0
        %v2711 = vadd.f32 0.0, %v2710
        %v2712 = vpop.f32.mrb[0].mxu0
        %2713 = vmatprep.mubr.bf16.mxu0 0
        %2714 = vmatmul.mubr.bf16.gmra.mrb[0].mxu0 %v2587
        %v2715 = vpop.f32.mrb[0].mxu0
        %v2716 = vadd.f32 0.0, %v2715
        %v2717 = vpop.f32.mrb[0].mxu0
        %v2718 = vpop.f32.mrb[0].mxu0
        %v2719 = vadd.f32 0.0, %v2718
        %v2720 = vpop.f32.mrb[0].mxu0
        %2721 = vmatprep.mubr.bf16.mxu0 0
        %2722 = vmatmul.mubr.bf16.gmra.mrb[0].mxu0 %v2588
        %v2723 = vpop.f32.mrb[0].mxu0
        %v2724 = vadd.f32 0.0, %v2723
        %v2725 = vpop.f32.mrb[0].mxu0
        %v2726 = vpop.f32.mrb[0].mxu0
        %v2727 = vadd.f32 0.0, %v2726
        %v2728 = vpop.f32.mrb[0].mxu0
        %2729 = vmatprep.mubr.bf16.mxu0 0
        %2730 = vmatmul.mubr.bf16.gmra.mrb[0].mxu0 %v2589
        %v2731 = vpop.f32.mrb[0].mxu0
        %v2732 = vadd.f32 0.0, %v2731
        %v2733 = vpop.f32.mrb[0].mxu0
        %v2734 = vpop.f32.mrb[0].mxu0
        %v2735 = vadd.f32 0.0, %v2734
        %v2736 = vpop.f32.mrb[0].mxu0
        %2737 = vmatprep.mubr.bf16.mxu0 0
        %2738 = vmatmul.mubr.bf16.gmra.mrb[0].mxu0 %v2590
        %v2739 = vpop.f32.mrb[0].mxu0
        %v2740 = vadd.f32 0.0, %v2739
        %v2741 = vpop.f32.mrb[0].mxu0
        %v2742 = vpop.f32.mrb[0].mxu0
        %v2743 = vadd.f32 0.0, %v2742
        %v2744 = vpop.f32.mrb[0].mxu0
        %2745 = vmatprep.mubr.bf16.mxu0 0
        %2746 = vmatmul.mubr.bf16.gmra.mrb[0].mxu0 %v2591
        %v2747 = vpop.f32.mrb[0].mxu0
        %v2748 = vadd.f32 0.0, %v2747
        %v2749 = vpop.f32.mrb[0].mxu0
        %v2750 = vpop.f32.mrb[0].mxu0
        %v2751 = vadd.f32 0.0, %v2750
        %v2752 = vpop.f32.mrb[0].mxu0
        %2753 = vmatprep.mubr.bf16.mxu0 0
        %2754 = vmatmul.mubr.bf16.gmra.mrb[0].mxu0 %v2592
        %v2755 = vpop.f32.mrb[0].mxu0
        %v2756 = vadd.f32 0.0, %v2755
        %v2757 = vpop.f32.mrb[0].mxu0
        %v2758 = vpop.f32.mrb[0].mxu0
        %v2759 = vadd.f32 0.0, %v2758
        %v2760 = vpop.f32.mrb[0].mxu0
        %2761 = vmatprep.mubr.bf16.mxu0 0
        %2762 = vmatmul.mubr.bf16.gmra.mrb[0].mxu0 %v2593
        %v2763 = vpop.f32.mrb[0].mxu0
        %v2764 = vadd.f32 0.0, %v2763
        %v2765 = vpop.f32.mrb[0].mxu0
        %v2766 = vpop.f32.mrb[0].mxu0
        %v2767 = vadd.f32 0.0, %v2766
        %v2768 = vpop.f32.mrb[0].mxu0
        %2769 = vmatprep.mubr.bf16.mxu0 0
        %2770 = vmatmul.mubr.bf16.gmra.mrb[0].mxu0 %v2594
        %v2771 = vpop.f32.mrb[0].mxu0
        %v2772 = vadd.f32 0.0, %v2771
        %v2773 = vpop.f32.mrb[0].mxu0
        %v2774 = vpop.f32.mrb[0].mxu0
        %v2775 = vadd.f32 0.0, %v2774
        %v2776 = vpop.f32.mrb[0].mxu0
        %2777 = vmatprep.mubr.bf16.mxu0 0
        %2778 = vmatmul.mubr.bf16.gmra.mrb[0].mxu0 %v2595
        %v2779 = vpop.f32.mrb[0].mxu0
        %v2780 = vadd.f32 0.0, %v2779
        %v2781 = vpop.f32.mrb[0].mxu0
        %v2782 = vpop.f32.mrb[0].mxu0
        %v2783 = vadd.f32 0.0, %v2782
        %v2784 = vpop.f32.mrb[0].mxu0
        %2785 = vmatprep.mubr.bf16.mxu0 0
        %2786 = vmatmul.mubr.bf16.gmra.mrb[0].mxu0 %v2596
        %v2787 = vpop.f32.mrb[0].mxu0
        %v2788 = vadd.f32 0.0, %v2787
        %v2789 = vpop.f32.mrb[0].mxu0
        %v2790 = vpop.f32.mrb[0].mxu0
        %v2791 = vadd.f32 0.0, %v2790
        %v2792 = vpop.f32.mrb[0].mxu0
        %2793 = vmatprep.mubr.bf16.mxu0 0
        %2794 = vmatmul.mubr.bf16.gmra.mrb[0].mxu0 %v2597
        %v2795 = vpop.f32.mrb[0].mxu0
        %v2796 = vadd.f32 0.0, %v2795
        %v2797 = vpop.f32.mrb[0].mxu0
        %v2798 = vpop.f32.mrb[0].mxu0
        %v2799 = vadd.f32 0.0, %v2798
        %v2800 = vpop.f32.mrb[0].mxu0
        %2801 = vmatprep.mubr.bf16.mxu0 0
        %2802 = vmatmul.mubr.bf16.gmra.mrb[0].mxu0 %v2598
        %v2803 = vpop.f32.mrb[0].mxu0
        %v2804 = vadd.f32 0.0, %v2803
        %v2805 = vpop.f32.mrb[0].mxu0
        %v2806 = vpop.f32.mrb[0].mxu0
        %v2807 = vadd.f32 0.0, %v2806
        %v2808 = vpop.f32.mrb[0].mxu0
        %2809 = vmatprep.mubr.bf16.mxu0 0
        %2810 = vmatmul.mubr.bf16.gmra.mrb[0].mxu0 %v2599
        %v2811 = vpop.f32.mrb[0].mxu0
        %v2812 = vadd.f32 0.0, %v2811
        %v2813 = vpop.f32.mrb[0].mxu0
        %v2814 = vpop.f32.mrb[0].mxu0
        %v2815 = vadd.f32 0.0, %v2814
        %v2816 = vpop.f32.mrb[0].mxu0
        %2817 = vmatprep.mubr.bf16.mxu0 0
        %2818 = vmatmul.mubr.bf16.gmra.mrb[0].mxu0 %v2600
        %v2819 = vpop.f32.mrb[0].mxu0
        %v2820 = vadd.f32 0.0, %v2819
        %v2821 = vpop.f32.mrb[0].mxu0
        %v2822 = vpop.f32.mrb[0].mxu0
        %v2823 = vadd.f32 0.0, %v2822
        %v2824 = vpop.f32.mrb[0].mxu0
        %2825 = vdwg.mxu0
        %v2826 = vadd.f32 %v2459, %v2700
        %v2827 = vadd.f32 %v2462, %v2703
        %v2828 = vadd.f32 %v2467, %v2708
        %v2829 = vadd.f32 %v2470, %v2711
        %v2830 = vadd.f32 %v2475, %v2716
        %v2831 = vadd.f32 %v2478, %v2719
        %v2832 = vadd.f32 %v2483, %v2724
        %v2833 = vadd.f32 %v2486, %v2727
        %v2834 = vadd.f32 %v2491, %v2732
        %v2835 = vadd.f32 %v2494, %v2735
        %v2836 = vadd.f32 %v2499, %v2740
        %v2837 = vadd.f32 %v2502, %v2743
        %v2838 = vadd.f32 %v2507, %v2748
        %v2839 = vadd.f32 %v2510, %v2751
        %v2840 = vadd.f32 %v2515, %v2756
        %v2841 = vadd.f32 %v2518, %v2759
        %v2842 = vadd.f32 %v2523, %v2764
        %v2843 = vadd.f32 %v2526, %v2767
        %v2844 = vadd.f32 %v2531, %v2772
        %v2845 = vadd.f32 %v2534, %v2775
        %v2846 = vadd.f32 %v2539, %v2780
        %v2847 = vadd.f32 %v2542, %v2783
        %v2848 = vadd.f32 %v2547, %v2788
        %v2849 = vadd.f32 %v2550, %v2791
        %v2850 = vadd.f32 %v2555, %v2796
        %v2851 = vadd.f32 %v2558, %v2799
        %v2852 = vadd.f32 %v2563, %v2804
        %v2853 = vadd.f32 %v2566, %v2807
        %v2854 = vadd.f32 %v2571, %v2812
        %v2855 = vadd.f32 %v2574, %v2815
        %v2856 = vadd.f32 %v2579, %v2820
        %v2857 = vadd.f32 %v2582, %v2823
        %v2858 = vld [vmem:[%s4] sm:$0x1]
        %v2860 = vlaneseq
        %v2861 = vshrl.u32 %v2860, 7
        %v2862 = vsub.s32 0, %v2861
        %v2863 = vrot.slane %v2858, %v2862
        %v2865 = vadd.f32 %v2826, %v2863
        %v2866 = vadd.f32 %v2827, %v2863
        %v2867 = vadd.f32 %v2828, %v2863
        %v2868 = vadd.f32 %v2829, %v2863
        %v2869 = vadd.f32 %v2830, %v2863
        %v2870 = vadd.f32 %v2831, %v2863
        %v2871 = vadd.f32 %v2832, %v2863
        %v2872 = vadd.f32 %v2833, %v2863
        %v2873 = vadd.f32 %v2834, %v2863
        %v2874 = vadd.f32 %v2835, %v2863
        %v2875 = vadd.f32 %v2836, %v2863
        %v2876 = vadd.f32 %v2837, %v2863
        %v2877 = vadd.f32 %v2838, %v2863
        %v2878 = vadd.f32 %v2839, %v2863
        %v2879 = vadd.f32 %v2840, %v2863
        %v2880 = vadd.f32 %v2841, %v2863
        %v2881 = vadd.f32 %v2842, %v2863
        %v2882 = vadd.f32 %v2843, %v2863
        %v2883 = vadd.f32 %v2844, %v2863
        %v2884 = vadd.f32 %v2845, %v2863
        %v2885 = vadd.f32 %v2846, %v2863
        %v2886 = vadd.f32 %v2847, %v2863
        %v2887 = vadd.f32 %v2848, %v2863
        %v2888 = vadd.f32 %v2849, %v2863
        %v2889 = vadd.f32 %v2850, %v2863
        %v2890 = vadd.f32 %v2851, %v2863
        %v2891 = vadd.f32 %v2852, %v2863
        %v2892 = vadd.f32 %v2853, %v2863
        %v2893 = vadd.f32 %v2854, %v2863
        %v2894 = vadd.f32 %v2855, %v2863
        %v2895 = vadd.f32 %v2856, %v2863
        %v2896 = vadd.f32 %v2857, %v2863
        %v2897 = vmax.f32 %v2865, 0.0
        %v2898 = vmax.f32 %v2866, 0.0
        %v2899 = vmax.f32 %v2867, 0.0
        %v2900 = vmax.f32 %v2868, 0.0
        %v2901 = vmax.f32 %v2869, 0.0
        %v2902 = vmax.f32 %v2870, 0.0
        %v2903 = vmax.f32 %v2871, 0.0
        %v2904 = vmax.f32 %v2872, 0.0
        %v2905 = vmax.f32 %v2873, 0.0
        %v2906 = vmax.f32 %v2874, 0.0
        %v2907 = vmax.f32 %v2875, 0.0
        %v2908 = vmax.f32 %v2876, 0.0
        %v2909 = vmax.f32 %v2877, 0.0
        %v2910 = vmax.f32 %v2878, 0.0
        %v2911 = vmax.f32 %v2879, 0.0
        %v2912 = vmax.f32 %v2880, 0.0
        %v2913 = vmax.f32 %v2881, 0.0
        %v2914 = vmax.f32 %v2882, 0.0
        %v2915 = vmax.f32 %v2883, 0.0
        %v2916 = vmax.f32 %v2884, 0.0
        %v2917 = vmax.f32 %v2885, 0.0
        %v2918 = vmax.f32 %v2886, 0.0
        %v2919 = vmax.f32 %v2887, 0.0
        %v2920 = vmax.f32 %v2888, 0.0
        %v2921 = vmax.f32 %v2889, 0.0
        %v2922 = vmax.f32 %v2890, 0.0
        %v2923 = vmax.f32 %v2891, 0.0
        %v2924 = vmax.f32 %v2892, 0.0
        %v2925 = vmax.f32 %v2893, 0.0
        %v2926 = vmax.f32 %v2894, 0.0
        %v2927 = vmax.f32 %v2895, 0.0
        %v2928 = vmax.f32 %v2896, 0.0
        %v2929 = vpack.c.bf16 %v2898, %v2897
        %v2930 = vpack.c.bf16 %v2900, %v2899
        %v2931 = vpack.c.bf16 %v2902, %v2901
        %v2932 = vpack.c.bf16 %v2904, %v2903
        %v2933 = vpack.c.bf16 %v2906, %v2905
        %v2934 = vpack.c.bf16 %v2908, %v2907
        %v2935 = vpack.c.bf16 %v2910, %v2909
        %v2936 = vpack.c.bf16 %v2912, %v2911
        %v2937 = vpack.c.bf16 %v2914, %v2913
        %v2938 = vpack.c.bf16 %v2916, %v2915
        %v2939 = vpack.c.bf16 %v2918, %v2917
        %v2940 = vpack.c.bf16 %v2920, %v2919
        %v2941 = vpack.c.bf16 %v2922, %v2921
        %v2942 = vpack.c.bf16 %v2924, %v2923
        %v2943 = vpack.c.bf16 %v2926, %v2925
        %v2944 = vpack.c.bf16 %v2928, %v2927
        %v2961 = vunpack.c.l.b16 %v2929
        %v2962 = vunpack.c.h.b16 %v2929
        %v2963 = vunpack.c.l.b16 %v2930
        %v2964 = vunpack.c.h.b16 %v2930
        %v2965 = vunpack.c.l.b16 %v2931
        %v2966 = vunpack.c.h.b16 %v2931
        %v2967 = vunpack.c.l.b16 %v2932
        %v2968 = vunpack.c.h.b16 %v2932
        %v2969 = vunpack.c.l.b16 %v2933
        %v2970 = vunpack.c.h.b16 %v2933
        %v2971 = vunpack.c.l.b16 %v2934
        %v2972 = vunpack.c.h.b16 %v2934
        %v2973 = vunpack.c.l.b16 %v2935
        %v2974 = vunpack.c.h.b16 %v2935
        %v2975 = vunpack.c.l.b16 %v2936
        %v2976 = vunpack.c.h.b16 %v2936
        %v2977 = vunpack.c.l.b16 %v2937
        %v2978 = vunpack.c.h.b16 %v2937
        %v2979 = vunpack.c.l.b16 %v2938
        %v2980 = vunpack.c.h.b16 %v2938
        %v2981 = vunpack.c.l.b16 %v2939
        %v2982 = vunpack.c.h.b16 %v2939
        %v2983 = vunpack.c.l.b16 %v2940
        %v2984 = vunpack.c.h.b16 %v2940
        %v2985 = vunpack.c.l.b16 %v2941
        %v2986 = vunpack.c.h.b16 %v2941
        %v2987 = vunpack.c.l.b16 %v2942
        %v2988 = vunpack.c.h.b16 %v2942
        %v2989 = vunpack.c.l.b16 %v2943
        %v2990 = vunpack.c.h.b16 %v2943
        %v2991 = vunpack.c.l.b16 %v2944
        %v2992 = vunpack.c.h.b16 %v2944
        %v2993 = vpack.c.b16 %v2961, %v2961
        %v2994 = vpack.c.b16 %v2962, %v2962
        %v2995 = vpack.c.b16 %v2963, %v2963
        %v2996 = vpack.c.b16 %v2964, %v2964
        %v2997 = vpack.c.b16 %v2965, %v2965
        %v2998 = vpack.c.b16 %v2966, %v2966
        %v2999 = vpack.c.b16 %v2967, %v2967
        %v3000 = vpack.c.b16 %v2968, %v2968
        %v3001 = vpack.c.b16 %v2969, %v2969
        %v3002 = vpack.c.b16 %v2970, %v2970
        %v3003 = vpack.c.b16 %v2971, %v2971
        %v3004 = vpack.c.b16 %v2972, %v2972
        %v3005 = vpack.c.b16 %v2973, %v2973
        %v3006 = vpack.c.b16 %v2974, %v2974
        %v3007 = vpack.c.b16 %v2975, %v2975
        %v3008 = vpack.c.b16 %v2976, %v2976
        %v3009 = vpack.c.b16 %v2977, %v2977
        %v3010 = vpack.c.b16 %v2978, %v2978
        %v3011 = vpack.c.b16 %v2979, %v2979
        %v3012 = vpack.c.b16 %v2980, %v2980
        %v3013 = vpack.c.b16 %v2981, %v2981
        %v3014 = vpack.c.b16 %v2982, %v2982
        %v3015 = vpack.c.b16 %v2983, %v2983
        %v3016 = vpack.c.b16 %v2984, %v2984
        %v3017 = vpack.c.b16 %v2985, %v2985
        %v3018 = vpack.c.b16 %v2986, %v2986
        %v3019 = vpack.c.b16 %v2987, %v2987
        %v3020 = vpack.c.b16 %v2988, %v2988
        %v3021 = vpack.c.b16 %v2989, %v2989
        %v3022 = vpack.c.b16 %v2990, %v2990
        %v3023 = vpack.c.b16 %v2991, %v2991
        %v3024 = vpack.c.b16 %v2992, %v2992
        %3057 = vst [vmem:[%s313] sm:$0xf] %v2993
        %3058 = vst [vmem:[%s313 + $0x4] sm:$0xf] %v2994
        %3059 = vst [vmem:[%s313 + $0x8] sm:$0xf] %v2995
        %3060 = vst [vmem:[%s313 + $0xc] sm:$0xf] %v2996
        %3061 = vst [vmem:[%s313 + $0x10] sm:$0xf] %v2997
        %3062 = vst [vmem:[%s313 + $0x14] sm:$0xf] %v2998
        %3063 = vst [vmem:[%s313 + $0x18] sm:$0xf] %v2999
        %3064 = vst [vmem:[%s313 + $0x1c] sm:$0xf] %v3000
        %3065 = vst [vmem:[%s313 + $0x20] sm:$0xf] %v3001
        %3066 = vst [vmem:[%s313 + $0x24] sm:$0xf] %v3002
        %3067 = vst [vmem:[%s313 + $0x28] sm:$0xf] %v3003
        %3068 = vst [vmem:[%s313 + $0x2c] sm:$0xf] %v3004
        %3069 = vst [vmem:[%s313 + $0x30] sm:$0xf] %v3005
        %3070 = vst [vmem:[%s313 + $0x34] sm:$0xf] %v3006
        %3071 = vst [vmem:[%s313 + $0x38] sm:$0xf] %v3007
        %3072 = vst [vmem:[%s313 + $0x3c] sm:$0xf] %v3008
        %3073 = vst [vmem:[%s313 + $0x40] sm:$0xf] %v3009
        %3074 = vst [vmem:[%s313 + $0x44] sm:$0xf] %v3010
        %3075 = vst [vmem:[%s313 + $0x48] sm:$0xf] %v3011
        %3076 = vst [vmem:[%s313 + $0x4c] sm:$0xf] %v3012
        %3077 = vst [vmem:[%s313 + $0x50] sm:$0xf] %v3013
        %3078 = vst [vmem:[%s313 + $0x54] sm:$0xf] %v3014
        %3079 = vst [vmem:[%s313 + $0x58] sm:$0xf] %v3015
        %3080 = vst [vmem:[%s313 + $0x5c] sm:$0xf] %v3016
        %3081 = vst [vmem:[%s313 + $0x60] sm:$0xf] %v3017
        %3082 = vst [vmem:[%s313 + $0x64] sm:$0xf] %v3018
        %3083 = vst [vmem:[%s313 + $0x68] sm:$0xf] %v3019
        %3084 = vst [vmem:[%s313 + $0x6c] sm:$0xf] %v3020
        %3085 = vst [vmem:[%s313 + $0x70] sm:$0xf] %v3021
        %3086 = vst [vmem:[%s313 + $0x74] sm:$0xf] %v3022
        %3087 = vst [vmem:[%s313 + $0x78] sm:$0xf] %v3023
        %3088 = vst [vmem:[%s313 + $0x7c] sm:$0xf] %v3024
        %s3089 = sand.u32 %s149, 1
        %s3090 = scalar_lea.sflag [#allocation4], %s3089
        %s3091 = sand.u32 %s149, 1
        %s3092 = smul.addr %s3091, 128
        %s3093 = scalar_lea.vmem [#allocation10], %s3092
        // Predicated region
        $region57: #{tpu_custom_call.1} parent=39 // pred_check
          %p3094 = pneg %p159
        $region58: #{tpu_custom_call.1} parent=39 // pred_check_branch
          %3096 = sbr.rel (%p3094) target = $region60
        $region59: #{tpu_custom_call.1} parent=39 // pred_region
          %s3097 = smul.u32 32, %s26
          %s3099 = ssub.s32 2048, 2048
          %3100 = vsyncadd %s3090, %s3099
          %s3101 = smul.addr %s3097, 64
          %s3102 = scalar_lea.hbm %s5, %s3101
          %s3103 = sshll.u32 %s3093, 4
          %s3104 = int_to_ptr.vmem [resolvable:$true] %s3103
          %3109 = dma.vmem_to_hbm [thread:$0]  %s3104, 2048, %s3102, %s3090, 64, 64, 4
        $region60: #{tpu_custom_call.1} parent=39 // pred_fallthru
          _
      $region40: #{tpu_custom_call.1} parent=5 // pred_fallthru
        _
      %p3110 = scmp.le.s32.totalorder 2, %s21
      // Predicated region
      $region61: #{tpu_custom_call.1} parent=5 // pred_check
        %p3111 = pneg %p3110
      $region62: #{tpu_custom_call.1} parent=5 // pred_check_branch
        %3113 = sbr.rel (%p3111) target = $region64
      $region63: #{tpu_custom_call.1} parent=5 // pred_region
        %s3114 = ssub.s32 %s21, 2
        // Predicated region
        $region65: #{tpu_custom_call.1} parent=63 // pred_check
          %p3115 = pneg %p165
        $region66: #{tpu_custom_call.1} parent=63 // pred_check_branch
          %3117 = sbr.rel (%p3115) target = $region68
        $region67: #{tpu_custom_call.1} parent=63 // pred_region
          %s3118 = sand.u32 %s150, 1
          %s3119 = scalar_lea.sflag [#allocation4], %s3118
          %s3120 = sand.u32 %s150, 1
          %s3121 = smul.addr %s3120, 128
          %s3122 = scalar_lea.vmem [#allocation10], %s3121
          %3123 = dma.done %s3119, 2048
        $region68: #{tpu_custom_call.1} parent=63 // pred_fallthru
          _
      $region64: #{tpu_custom_call.1} parent=5 // pred_fallthru
        _
    $region6: #{tpu_custom_call.1} parent=1 // loop_footer
      %s25 = sadd.s32 1, %s21
    $region7: #{tpu_custom_call.1} parent=1 // loop_footer_branch
      %20 = sbr.rel target = $region3
    $region8: #{tpu_custom_call.1} parent=1 // loop_exit
      _
    %3124 = vsyncpa [#allocation3], 1
    %s3125 = scalar_lea.sflag [#allocation3], 1
    %3126 = vsyncpa %s3125, 1
    %3127 = vsyncpa [#allocation6], 1
    %s3128 = scalar_lea.sflag [#allocation6], 1
    %3129 = vsyncpa %s3128, 1
    %3130 = vsyncpa [#allocation9], 1
    %3131 = vsyncpa [#allocation4], 1
    %s3132 = scalar_lea.sflag [#allocation4], 1
    %3133 = vsyncpa %s3132, 1

</llo_original>
